<compile_context>
chip_gen: v7x
topology: tpu7x:2x2x1
jax: 0.10.0
libtpu: 0.0.40
codegen_flags: <defaults>
</compile_context>

<pallas_src>
import math

import numpy as np
import jax
import jax.numpy as jnp
from jax.experimental import pallas as pl
from jax.experimental.pallas import tpu as pltpu


def get_rotary_matrix(context_window, embedding_dim):
    # Exact port of the *module-level* function used in __init__ (including
    # the line that overwrites R[p, 2i, 2i] with -sin(m_theta)).
    R = np.zeros((context_window, embedding_dim, embedding_dim), dtype=np.float32)
    for position in range(context_window):
        for i in range(embedding_dim // 2):
            theta = 10000.0 ** (-2.0 * (i - 1) / embedding_dim)
            m_theta = position * theta
            R[position, 2 * i, 2 * i] = np.cos(theta)
            R[position, 2 * i, 2 * i] = -np.sin(m_theta)      # overwrite (as in source)
            R[position, 2 * i + 1, 2 * i] = np.sin(m_theta)
            R[position, 2 * i + 1, 2 * i + 1] = np.cos(m_theta)
    return jnp.asarray(R)


def rope_attn_kernel(x_ref, w_ref, cs_ref, co_ref, o_ref):
    # x_ref:  (block_b, m, d) block of the input
    # w_ref:  (d, 5d) fused weights [Wq^T | Wq^T@S | Wk^T | Wk^T@S | Wv^T]
    # cs_ref: (block_b*m, d) diagonal rotary coefficients (tiled over batch)
    # co_ref: (block_b*m, d) off-diagonal (pair-partner) rotary coefficients
    bblk, m, d = x_ref.shape
    rows = bblk * m

    x2 = x_ref[...].reshape(rows, d)                       # cheap: lane dim intact

    # One wide MXU pass for all projections (lane-dense output, 5d lanes).
    proj = jnp.dot(x2, w_ref[...], preferred_element_type=jnp.float32)

    q, qs = proj[:, 0 * d:1 * d], proj[:, 1 * d:2 * d]
    k, ks = proj[:, 2 * d:3 * d], proj[:, 3 * d:4 * d]
    v = proj[:, 4 * d:5 * d]

    cs = cs_ref[...]
    co = co_ref[...]

    # Elementwise rotary: q_rot[p,e] = R[p,e,e]*q[p,e] + R[p,partner(e),e]*q[p,partner(e)]
    q_rot = cs * q + co * qs
    k_rot = cs * k + co * ks

    q3 = q_rot.reshape(bblk, m, d)
    k3 = k_rot.reshape(bblk, m, d)
    v3 = v.reshape(bblk, m, d)

    scale = 1.0 / math.sqrt(d)
    # Batched QK^T without materializing a transpose (contract last dims).
    scores = jax.lax.dot_general(
        q3, k3, dimension_numbers=(((2,), (2,)), ((0,), (0,))),
        preferred_element_type=jnp.float32) * scale        # (bblk, m, m)

    row = jax.lax.broadcasted_iota(jnp.int32, (m, m), 0)
    col = jax.lax.broadcasted_iota(jnp.int32, (m, m), 1)
    scores = jnp.where((row >= col)[None], scores, -jnp.inf)   # causal mask

    scores = scores - jnp.max(scores, axis=-1, keepdims=True)
    p = jnp.exp(scores)
    denom = jnp.sum(p, axis=-1, keepdims=True)
    p = p * pl.reciprocal(denom, approx=True)               # EUP vrcp (free slot)

    out = jax.lax.dot_general(
        p, v3, dimension_numbers=(((2,), (1,)), ((0,), (0,))),
        preferred_element_type=jnp.float32)                 # (bblk, m, d)
    o_ref[...] = out


def _choose_block_b(b, m, target_rows=128):
    # Largest batch block such that block_b*m fills (but does not exceed) the
    # target MXU M rows, while keeping >=2 grid steps for v7x's two TensorCores.
    divisors = [c for c in range(1, b + 1) if b % c == 0]
    cands = [c for c in divisors if c * m <= target_rows and b // c >= 2]
    if not cands:
        cands = [c for c in divisors if c * m <= target_rows] or [1]
    return max(cands)


def rope_masked_attention_head(x, wq_t, wk_t, wv_t, R_full, *, block_b=None):
    b, m, d = x.shape
    R = R_full[:m]                                           # as in forward()

    if block_b is None:
        block_b = _choose_block_b(b, m)
    assert b % block_b == 0
    rows = block_b * m

    # Extract the 2x2-block coefficients from the exact (quirky) R.
    idx = jnp.arange(d)
    partner = idx ^ 1                                        # even<->odd partner
    c_self = R[:, idx, idx]                                  # R[p, e, e]          (m, d)
    c_other = R[:, partner, idx]                             # R[p, partner(e), e] (m, d)
    cs = jnp.tile(c_self, (block_b, 1))                      # (rows, d)
    co = jnp.tile(c_other, (block_b, 1))                     # (rows, d)

    # Pair-swap permutation folded into the weights: x @ (W @ S) == (x @ W) @ S.
    S = jnp.zeros((d, d), jnp.float32).at[partner, idx].set(1.0)
    w_fused = jnp.concatenate(
        [wq_t, wq_t @ S, wk_t, wk_t @ S, wv_t], axis=1)      # (d, 5d)

    grid = (b // block_b,)
    return pl.pallas_call(
        rope_attn_kernel,
        out_shape=jax.ShapeDtypeStruct((b, m, d), jnp.float32),
        grid_spec=pltpu.PrefetchScalarGridSpec(
            num_scalar_prefetch=0,
            grid=grid,
            in_specs=[
                pl.BlockSpec((block_b, m, d), lambda i: (i, 0, 0)),   # x
                pl.BlockSpec((d, 5 * d), lambda i: (0, 0)),           # fused weights
                pl.BlockSpec((rows, d), lambda i: (0, 0)),            # c_self
                pl.BlockSpec((rows, d), lambda i: (0, 0)),            # c_other
            ],
            out_specs=pl.BlockSpec((block_b, m, d), lambda i: (i, 0, 0)),
        ),
        compiler_params=pltpu.CompilerParams(
            dimension_semantics=("parallel",),
            # Explicit (generous, but well under physical VMEM on all chips);
            # blocks here are tiny, this just leaves room to raise block_b.
            vmem_limit_bytes=32 * 1024 * 1024,
        ),
    )(x, w_fused, cs, co)


def reference_forward(x, wq_t, wk_t, wv_t, R_full):
    # Pure-JAX reference using the full dense R contraction (f32 throughout).
    b, m, d = x.shape
    q = x @ wq_t
    k = x @ wk_t
    v = x @ wv_t
    R = R_full[:m]
    q_rot = jnp.einsum("bmd,mde->bme", q, R)
    k_rot = jnp.einsum("bmd,mde->bme", k, R)
    scores = jnp.einsum("bqd,bkd->bqk", q_rot, k_rot) / math.sqrt(d)
    mask = jnp.tril(jnp.ones((m, m), dtype=bool))
    scores = jnp.where(mask[None], scores, -jnp.inf)
    p = jax.nn.softmax(scores, axis=-1)
    return jnp.einsum("bqk,bkd->bqd", p, v)


if __name__ == "__main__":
    # config: d_model=32, context_window=16; run on sequences of length m=8.
    d_model = 32
    context_window = 16
    batch = 16
    m = 8

    key = jax.random.PRNGKey(0)
    kx, kq, kk, kv = jax.random.split(key, 4)

    x = jax.random.normal(kx, (batch, m, d_model), dtype=jnp.float32)

    # nn.Linear(d_model, d_model, bias=False): weight shape (out, in),
    # uniform(-1/sqrt(in), 1/sqrt(in)).  Pass W.T so the kernel does x @ W.T.
    bound = 1.0 / math.sqrt(d_model)
    wq = jax.random.uniform(kq, (d_model, d_model), jnp.float32, -bound, bound)
    wk = jax.random.uniform(kk, (d_model, d_model), jnp.float32, -bound, bound)
    wv = jax.random.uniform(kv, (d_model, d_model), jnp.float32, -bound, bound)
    wq_t, wk_t, wv_t = wq.T, wk.T, wv.T

    R_full = get_rotary_matrix(context_window, d_model)

    out = jax.block_until_ready(
        rope_masked_attention_head(x, wq_t, wk_t, wv_t, R_full))
    ref = jax.block_until_ready(reference_forward(x, wq_t, wk_t, wv_t, R_full))

    # approx=True reciprocal in the softmax denominator -> ~1e-4 relative error;
    # everything else is exact f32, so a 2e-3 tolerance is comfortably safe.
    np.testing.assert_allclose(np.asarray(out), np.asarray(ref),
                               rtol=2e-3, atol=2e-3)

    print("KERNEL_OK")
</pallas_src>

<mosaic_0001>
module attributes {stable_mosaic.version = 11 : i64} {
  func.func @rope_attn_kernel(%arg0: i32, %arg1: memref<8x8x32xf32, #tpu.memory_space<vmem>>, %arg2: memref<32x160xf32, #tpu.memory_space<vmem>>, %arg3: memref<64x32xf32, #tpu.memory_space<vmem>>, %arg4: memref<64x32xf32, #tpu.memory_space<vmem>>, %arg5: memref<8x8x32xf32, #tpu.memory_space<vmem>>) attributes {dimension_semantics = [#tpu.dimension_semantics<parallel>], iteration_bounds = array<i64: 2>, scalar_prefetch = 0 : i64, scratch_operands = 0 : i64, tpu.core_type = #tpu.core_type<tc>, window_params = [{transform_indices = @transform_0, window_bounds = array<i64: 8, 8, 32>}, {pipeline_mode = #tpu.pipeline_mode<synchronous>, transform_indices = @transform_1, window_bounds = array<i64: 32, 160>}, {pipeline_mode = #tpu.pipeline_mode<synchronous>, transform_indices = @transform_2, window_bounds = array<i64: 64, 32>}, {pipeline_mode = #tpu.pipeline_mode<synchronous>, transform_indices = @transform_3, window_bounds = array<i64: 64, 32>}, {transform_indices = @transform_4, window_bounds = array<i64: 8, 8, 32>}]} {
    %c0 = arith.constant 0 : index
    %c0_0 = arith.constant 0 : index
    %c0_1 = arith.constant 0 : index
    %0 = vector.load %arg1[%c0, %c0_0, %c0_1] : memref<8x8x32xf32, #tpu.memory_space<vmem>>, vector<8x8x32xf32>
    %1 = vector.shape_cast %0 : vector<8x8x32xf32> to vector<64x32xf32>
    %c0_2 = arith.constant 0 : index
    %c0_3 = arith.constant 0 : index
    %2 = vector.load %arg2[%c0_2, %c0_3] : memref<32x160xf32, #tpu.memory_space<vmem>>, vector<32x160xf32>
    %cst = arith.constant dense<0.000000e+00> : vector<64x160xf32>
    %3 = tpu.matmul %1, %2, %cst {dimension_numbers = #tpu.dot_dimension_numbers<[1], [0], [0], [1], [0, 0, 1, 1], [], []>} : vector<64x32xf32>, vector<32x160xf32>, vector<64x160xf32> -> vector<64x160xf32>
    %4 = vector.extract_strided_slice %3 {offsets = [0, 0], sizes = [64, 32], strides = [1, 1]} : vector<64x160xf32> to vector<64x32xf32>
    %5 = vector.extract_strided_slice %3 {offsets = [0, 32], sizes = [64, 32], strides = [1, 1]} : vector<64x160xf32> to vector<64x32xf32>
    %6 = vector.extract_strided_slice %3 {offsets = [0, 64], sizes = [64, 32], strides = [1, 1]} : vector<64x160xf32> to vector<64x32xf32>
    %7 = vector.extract_strided_slice %3 {offsets = [0, 96], sizes = [64, 32], strides = [1, 1]} : vector<64x160xf32> to vector<64x32xf32>
    %8 = vector.extract_strided_slice %3 {offsets = [0, 128], sizes = [64, 32], strides = [1, 1]} : vector<64x160xf32> to vector<64x32xf32>
    %c0_4 = arith.constant 0 : index
    %c0_5 = arith.constant 0 : index
    %9 = vector.load %arg3[%c0_4, %c0_5] : memref<64x32xf32, #tpu.memory_space<vmem>>, vector<64x32xf32>
    %c0_6 = arith.constant 0 : index
    %c0_7 = arith.constant 0 : index
    %10 = vector.load %arg4[%c0_6, %c0_7] : memref<64x32xf32, #tpu.memory_space<vmem>>, vector<64x32xf32>
    %11 = arith.mulf %9, %4 : vector<64x32xf32>
    %12 = arith.mulf %10, %5 : vector<64x32xf32>
    %13 = arith.addf %11, %12 : vector<64x32xf32>
    %14 = arith.mulf %9, %6 : vector<64x32xf32>
    %15 = arith.mulf %10, %7 : vector<64x32xf32>
    %16 = arith.addf %14, %15 : vector<64x32xf32>
    %17 = vector.shape_cast %13 : vector<64x32xf32> to vector<8x8x32xf32>
    %18 = vector.shape_cast %16 : vector<64x32xf32> to vector<8x8x32xf32>
    %19 = vector.shape_cast %8 : vector<64x32xf32> to vector<8x8x32xf32>
    %cst_8 = arith.constant dense<0.000000e+00> : vector<8x8x8xf32>
    %20 = tpu.matmul %17, %18, %cst_8 {dimension_numbers = #tpu.dot_dimension_numbers<[2], [2], [1], [1], [0, 0, 0, 1, 1, 1], [0], [0]>} : vector<8x8x32xf32>, vector<8x8x32xf32>, vector<8x8x8xf32> -> vector<8x8x8xf32>
    %cst_9 = arith.constant 0.176776692 : f32
    %21 = vector.broadcast %cst_9 : f32 to vector<8x8x8xf32>
    %22 = arith.mulf %20, %21 : vector<8x8x8xf32>
    %23 = tpu.iota {dimensions = array<i32: 0>} : vector<8x8xi32>
    %24 = tpu.iota {dimensions = array<i32: 1>} : vector<8x8xi32>
    %25 = arith.cmpi sge, %23, %24 : vector<8x8xi32>
    %26 = vector.shape_cast %25 : vector<8x8xi1> to vector<1x8x8xi1>
    %cst_10 = arith.constant 0xFF800000 : f32
    %27 = vector.shape_cast %26 : vector<1x8x8xi1> to vector<1x8x8xi1>
    %28 = vector.broadcast %27 : vector<1x8x8xi1> to vector<8x8x8xi1>
    %29 = vector.broadcast %cst_10 : f32 to vector<8x8x8xf32>
    %30 = arith.select %28, %22, %29 : vector<8x8x8xi1>, vector<8x8x8xf32>
    %cst_11 = arith.constant dense<0xFF800000> : vector<8x8xf32>
    %31 = vector.multi_reduction <maximumf>, %30, %cst_11 [2] : vector<8x8x8xf32> to vector<8x8xf32>
    %32 = vector.shape_cast %31 : vector<8x8xf32> to vector<8x8x1xf32>
    %33 = vector.broadcast %32 : vector<8x8x1xf32> to vector<8x8x8xf32>
    %34 = arith.subf %30, %33 : vector<8x8x8xf32>
    %35 = math.exp %34 : vector<8x8x8xf32>
    %cst_12 = arith.constant dense<0.000000e+00> : vector<8x8xf32>
    %36 = vector.multi_reduction <add>, %35, %cst_12 [2] : vector<8x8x8xf32> to vector<8x8xf32>
    %37 = vector.shape_cast %36 : vector<8x8xf32> to vector<8x8x1xf32>
    %38 = tpu.reciprocal %37 {approx = true} : vector<8x8x1xf32> -> vector<8x8x1xf32>
    %39 = vector.broadcast %38 : vector<8x8x1xf32> to vector<8x8x8xf32>
    %40 = arith.mulf %35, %39 : vector<8x8x8xf32>
    %cst_13 = arith.constant dense<0.000000e+00> : vector<8x8x32xf32>
    %41 = tpu.matmul %40, %19, %cst_13 {dimension_numbers = #tpu.dot_dimension_numbers<[2], [1], [1], [2], [0, 0, 0, 1, 1, 2], [0], [0]>} : vector<8x8x8xf32>, vector<8x8x32xf32>, vector<8x8x32xf32> -> vector<8x8x32xf32>
    %c0_14 = arith.constant 0 : index
    %c0_15 = arith.constant 0 : index
    %c0_16 = arith.constant 0 : index
    %42 = vector.load %arg5[%c0_14, %c0_15, %c0_16] : memref<8x8x32xf32, #tpu.memory_space<vmem>>, vector<8x8x32xf32>
    tpu.vector_store %arg5[%c0_14, %c0_15, %c0_16], %41 {strides = array<i32>} : memref<8x8x32xf32, #tpu.memory_space<vmem>>, vector<8x8x32xf32>,
    return
  }
  func.func @transform_0(%arg0: i32) -> (i32, i32, i32) {
    %c0_i32 = arith.constant 0 : i32
    %c0_i32_0 = arith.constant 0 : i32
    %c0_i32_1 = arith.constant 0 : i32
    return %arg0, %c0_i32, %c0_i32_0 : i32, i32, i32
  }
  func.func @transform_1(%arg0: i32) -> (i32, i32) {
    %c0_i32 = arith.constant 0 : i32
    %c0_i32_0 = arith.constant 0 : i32
    %c0_i32_1 = arith.constant 0 : i32
    return %c0_i32, %c0_i32_0 : i32, i32
  }
  func.func @transform_2(%arg0: i32) -> (i32, i32) {
    %c0_i32 = arith.constant 0 : i32
    %c0_i32_0 = arith.constant 0 : i32
    %c0_i32_1 = arith.constant 0 : i32
    return %c0_i32, %c0_i32_0 : i32, i32
  }
  func.func @transform_3(%arg0: i32) -> (i32, i32) {
    %c0_i32 = arith.constant 0 : i32
    %c0_i32_0 = arith.constant 0 : i32
    %c0_i32_1 = arith.constant 0 : i32
    return %c0_i32, %c0_i32_0 : i32, i32
  }
  func.func @transform_4(%arg0: i32) -> (i32, i32, i32) {
    %c0_i32 = arith.constant 0 : i32
    %c0_i32_0 = arith.constant 0 : i32
    %c0_i32_1 = arith.constant 0 : i32
    return %arg0, %c0_i32, %c0_i32_0 : i32, i32, i32
  }
}

</mosaic_0001>

<llo_original>
// kernel: tpu_custom_call.1
$region0: #{tpu_custom_call.1}
  #allocation0 [shape = 'u32[]', space=smem, size = 0x4, offset = 0x4, fixed_abs, tag = 'smem constant byte address 0x4 - core index']
  #allocation1 [shape = 'u32[144,128]{1,0:T(1,128)}', space=vmem, size = 0x12000, scoped, tag = 'internal scratch']
  %s0 = inlined_call_operand.vmem [shape: f32[16,8,32], index: 0, kind: input, shape index: {}]
  %s1 = inlined_call_operand.vmem [shape: f32[32,160], index: 1, kind: input, shape index: {}]
  %s2 = inlined_call_operand.vmem [shape: f32[64,32], index: 2, kind: input, shape index: {}]
  %s3 = inlined_call_operand.vmem [shape: f32[64,32], index: 3, kind: input, shape index: {}]
  %s4 = inlined_call_operand.hbm [shape: f32[16,8,32], index: 4, kind: output, shape index: {}]
  %s5 = sld [smem:[#allocation0]]
  $region49: #{tpu_custom_call.1} parent=0
    _
  %s7 = ssub.s32 1, %s5
  %s8 = scalar_select 0, %s7, %s5
  $region1: #{tpu_custom_call.1} parent=0
    #allocation2 [shape = 'u8[65536]{0}', space=vmem, size = 0x10000, scoped, tag = 'output window, operand 0']
    #allocation3 [shape = 's32[2]{0}', space=sflag, size = 0x8, scoped, tag = 'scoped memory for tpu_custom_call.1']
    %9 = vsyncpa [#allocation3], 0
    %s10 = scalar_lea.sflag [#allocation3], 1
    %11 = vsyncpa %s10, 0
    loop: start=0, step=1, limit=4
    $region2: #{tpu_custom_call.1} parent=1 // loop_pre_header
      _
    $region3: #{tpu_custom_call.1} parent=1 // loop_header
      %s13 = sphi 0, %s17
      %p14 = scmp.ge.s32.totalorder %s13, 4
      %s23 = sphi 0, %s25
      %s26 = sphi 0, %s23
      %s27 = sphi 0, %s26
      %s43 = sphi 0, %s27
      %s47 = sphi 0, %s47
      %s49 = sphi 0, %s47
      %s50 = sphi 0, %s49
      %s64 = sphi 0, %s50
      %s68 = sphi 0, %s68
      %s70 = sphi 0, %s68
      %s71 = sphi 0, %s70
      %s85 = sphi 0, %s71
      %s89 = sphi 0, %s89
      %s91 = sphi 0, %s89
      %s92 = sphi 0, %s91
      %s106 = sphi 0, %s92
      %s112 = sphi 0, %s114
      %s115 = sphi 0, %s112
      %s116 = sphi 0, %s115
      %s132 = sphi 0, %s116
    $region4: #{tpu_custom_call.1} parent=1 // loop_header_branch
      %16 = sbr.rel (%p14) target = $region8
    $region5: #{tpu_custom_call.1} parent=1 // loop_body
      %s18 = ssub.s32 %s13, 1
      %s19 = ssub.s32 %s13, 2
      %s20 = sadd.s32 %s13, 1
      %s21 = ssub.s32 %s13, %s20
      %p22 = scmp.eq.s32.totalorder %s21, 0
      %s24 = sadd.s32 %s23, 1
      %s25 = scalar_select %p22, %s23, %s24
      %p28 = pneg %p22
      %p29 = scmp.eq.s32.totalorder %s13, 1
      %p30 = por %p28, %p29
      %p31 = scmp.ne.s32.totalorder %s23, %s26
      %p32 = scmp.eq.s32.totalorder %s13, 0
      %p33 = por %p31, %p32
      %p34 = scmp.ne.s32.totalorder %s23, %s26
      %p35 = scmp.eq.s32.totalorder %s18, 1
      %p36 = por %p34, %p35
      %p37 = scmp.ne.s32.totalorder %s26, %s27
      %p38 = scmp.eq.s32.totalorder %s18, 0
      %p39 = por %p37, %p38
      %p40 = scmp.ne.s32.totalorder %s26, %s27
      %p41 = scmp.eq.s32.totalorder %s19, 1
      %p42 = por %p40, %p41
      %p44 = scmp.ne.s32.totalorder %s27, %s43
      %p45 = scmp.eq.s32.totalorder %s19, 0
      %p46 = por %p44, %p45
      %s48 = sadd.s32 %s47, 1
      %p51 = scmp.eq.s32.totalorder %s13, 1
      %p52 = scmp.ne.s32.totalorder %s47, %s49
      %p53 = scmp.eq.s32.totalorder %s13, 0
      %p54 = por %p52, %p53
      %p55 = scmp.ne.s32.totalorder %s47, %s49
      %p56 = scmp.eq.s32.totalorder %s18, 1
      %p57 = por %p55, %p56
      %p58 = scmp.ne.s32.totalorder %s49, %s50
      %p59 = scmp.eq.s32.totalorder %s18, 0
      %p60 = por %p58, %p59
      %p61 = scmp.ne.s32.totalorder %s49, %s50
      %p62 = scmp.eq.s32.totalorder %s19, 1
      %p63 = por %p61, %p62
      %p65 = scmp.ne.s32.totalorder %s50, %s64
      %p66 = scmp.eq.s32.totalorder %s19, 0
      %p67 = por %p65, %p66
      %s69 = sadd.s32 %s68, 1
      %p72 = scmp.eq.s32.totalorder %s13, 1
      %p73 = scmp.ne.s32.totalorder %s68, %s70
      %p74 = scmp.eq.s32.totalorder %s13, 0
      %p75 = por %p73, %p74
      %p76 = scmp.ne.s32.totalorder %s68, %s70
      %p77 = scmp.eq.s32.totalorder %s18, 1
      %p78 = por %p76, %p77
      %p79 = scmp.ne.s32.totalorder %s70, %s71
      %p80 = scmp.eq.s32.totalorder %s18, 0
      %p81 = por %p79, %p80
      %p82 = scmp.ne.s32.totalorder %s70, %s71
      %p83 = scmp.eq.s32.totalorder %s19, 1
      %p84 = por %p82, %p83
      %p86 = scmp.ne.s32.totalorder %s71, %s85
      %p87 = scmp.eq.s32.totalorder %s19, 0
      %p88 = por %p86, %p87
      %s90 = sadd.s32 %s89, 1
      %p93 = scmp.eq.s32.totalorder %s13, 1
      %p94 = scmp.ne.s32.totalorder %s89, %s91
      %p95 = scmp.eq.s32.totalorder %s13, 0
      %p96 = por %p94, %p95
      %p97 = scmp.ne.s32.totalorder %s89, %s91
      %p98 = scmp.eq.s32.totalorder %s18, 1
      %p99 = por %p97, %p98
      %p100 = scmp.ne.s32.totalorder %s91, %s92
      %p101 = scmp.eq.s32.totalorder %s18, 0
      %p102 = por %p100, %p101
      %p103 = scmp.ne.s32.totalorder %s91, %s92
      %p104 = scmp.eq.s32.totalorder %s19, 1
      %p105 = por %p103, %p104
      %p107 = scmp.ne.s32.totalorder %s92, %s106
      %p108 = scmp.eq.s32.totalorder %s19, 0
      %p109 = por %p107, %p108
      %s110 = ssub.s32 %s13, %s20
      %p111 = scmp.eq.s32.totalorder %s110, 0
      %s113 = sadd.s32 %s112, 1
      %s114 = scalar_select %p111, %s112, %s113
      %p117 = pneg %p111
      %p118 = scmp.eq.s32.totalorder %s13, 1
      %p119 = por %p117, %p118
      %p120 = scmp.ne.s32.totalorder %s112, %s115
      %p121 = scmp.eq.s32.totalorder %s13, 0
      %p122 = por %p120, %p121
      %p123 = scmp.ne.s32.totalorder %s112, %s115
      %p124 = scmp.eq.s32.totalorder %s18, 1
      %p125 = por %p123, %p124
      %p126 = scmp.ne.s32.totalorder %s115, %s116
      %p127 = scmp.eq.s32.totalorder %s18, 0
      %p128 = por %p126, %p127
      %p129 = scmp.ne.s32.totalorder %s115, %s116
      %p130 = scmp.eq.s32.totalorder %s19, 1
      %p131 = por %p129, %p130
      %p133 = scmp.ne.s32.totalorder %s116, %s132
      %p134 = scmp.eq.s32.totalorder %s19, 0
      %p135 = por %p133, %p134
      %p136 = scmp.le.s32.totalorder 1, %s13
      %p137 = scmp.lt.s32.totalorder %s13, 3
      %p138 = pnand %p136, %p137
      %p139 = pneg %p138
      // Predicated region
      $region9: #{tpu_custom_call.1} parent=5 // pred_check
        _
      $region10: #{tpu_custom_call.1} parent=5 // pred_check_branch
        %141 = sbr.rel (%p138) target = $region12
      $region11: #{tpu_custom_call.1} parent=5 // pred_region
        %s142 = ssub.s32 %s13, 1
        // Predicated region
        $region13: #{tpu_custom_call.1} parent=11 // pred_check
          %p143 = pneg %p60
        $region14: #{tpu_custom_call.1} parent=11 // pred_check_branch
          %145 = sbr.rel (%p143) target = $region16
        $region15: #{tpu_custom_call.1} parent=11 // pred_region
          _
        $region16: #{tpu_custom_call.1} parent=11 // pred_fallthru
          _
        // Predicated region
        $region17: #{tpu_custom_call.1} parent=11 // pred_check
          %p146 = pneg %p81
        $region18: #{tpu_custom_call.1} parent=11 // pred_check_branch
          %148 = sbr.rel (%p146) target = $region20
        $region19: #{tpu_custom_call.1} parent=11 // pred_region
          _
        $region20: #{tpu_custom_call.1} parent=11 // pred_fallthru
          _
        // Predicated region
        $region21: #{tpu_custom_call.1} parent=11 // pred_check
          %p149 = pneg %p102
        $region22: #{tpu_custom_call.1} parent=11 // pred_check_branch
          %151 = sbr.rel (%p149) target = $region24
        $region23: #{tpu_custom_call.1} parent=11 // pred_region
          _
        $region24: #{tpu_custom_call.1} parent=11 // pred_fallthru
          _
      $region12: #{tpu_custom_call.1} parent=5 // pred_fallthru
        _
      %p152 = scmp.lt.s32.totalorder %s13, 2
      // Predicated region
      $region25: #{tpu_custom_call.1} parent=5 // pred_check
        %p153 = pneg %p152
      $region26: #{tpu_custom_call.1} parent=5 // pred_check_branch
        %155 = sbr.rel (%p153) target = $region28
      $region27: #{tpu_custom_call.1} parent=5 // pred_region
        // Predicated region
        $region29: #{tpu_custom_call.1} parent=27 // pred_check
          %p156 = pneg %p33
        $region30: #{tpu_custom_call.1} parent=27 // pred_check_branch
          %158 = sbr.rel (%p156) target = $region32
        $region31: #{tpu_custom_call.1} parent=27 // pred_region
          %s159 = smul.u32 8, %s13
          %p160 = scmp.lt.s32.totalorder %s159, 15
          %s161 = scalar_select %p160, %s159, 15
          %s162 = smul.addr %s161, 8
          %s163 = scalar_lea.vmem %s0, %s162
          %s164 = smul.u32 8, %s13
        $region32: #{tpu_custom_call.1} parent=27 // pred_fallthru
          _
      $region28: #{tpu_custom_call.1} parent=5 // pred_fallthru
        _
      %p165 = scmp.le.s32.totalorder 1, %s13
      %p166 = scmp.lt.s32.totalorder %s13, 3
      %p167 = pnand %p165, %p166
      %p168 = pneg %p167
      // Predicated region
      $region33: #{tpu_custom_call.1} parent=5 // pred_check
        _
      $region34: #{tpu_custom_call.1} parent=5 // pred_check_branch
        %170 = sbr.rel (%p167) target = $region36
      $region35: #{tpu_custom_call.1} parent=5 // pred_region
        %s171 = ssub.s32 %s13, 1
        %s172 = smul.u32 8, %s18
        %p173 = scmp.lt.s32.totalorder %s172, 15
        %s174 = scalar_select %p173, %s172, 15
        %s175 = smul.addr %s174, 8
        %s176 = scalar_lea.vmem %s0, %s175
        %p177 = pneg %p39
        %p178 = pneg %p36
        %p179 = pneg %p60
        %p180 = pneg %p57
        %p181 = pneg %p81
        %p182 = pneg %p78
        %p183 = pneg %p102
        %p184 = pneg %p99
        %p185 = pneg %p128
        %p186 = pneg %p125
        %s187 = sand.u32 %s115, 1
        %s188 = scalar_lea.sflag [#allocation3], %s187
        %s189 = sand.u32 %s115, 1
        %s190 = smul.addr %s189, 64
        %s191 = scalar_lea.vmem [#allocation2], %s190
        %s192 = smul.u32 8, %s18
        %p193 = scmp.lt.s32.totalorder %s192, 15
        %s194 = scalar_select %p193, %s192, 15
        %s195 = smul.addr %s194, 8
        %s196 = scalar_lea.vmem %s0, %s195
        %s197 = smul.u32 8, %s18
        %s198 = smul.u32 8, %s18
        %v199 = vld [vmem:[%s196] sm:$0xff]
        %v200 = vld [vmem:[%s196 + $0x8] sm:$0xff]
        %v201 = vld [vmem:[%s196 + $0x10] sm:$0xff]
        %v202 = vld [vmem:[%s196 + $0x18] sm:$0xff]
        %v203 = vld [vmem:[%s196 + $0x20] sm:$0xff]
        %v204 = vld [vmem:[%s196 + $0x28] sm:$0xff]
        %v205 = vld [vmem:[%s196 + $0x30] sm:$0xff]
        %v206 = vld [vmem:[%s196 + $0x38] sm:$0xff]
        %v207 = vld [vmem:[%s1] sm:$0xff]
        %v208 = vld [vmem:[%s1 + $0x8] sm:$0xff]
        %v209 = vld [vmem:[%s1 + $0x10] sm:$0xff]
        %v210 = vld [vmem:[%s1 + $0x18] sm:$0xff]
        %v211 = vld [vmem:[%s1 + $0x20] sm:$0xff]
        %v212 = vld [vmem:[%s1 + $0x28] sm:$0xff]
        %v213 = vld [vmem:[%s1 + $0x30] sm:$0xff]
        %v214 = vld [vmem:[%s1 + $0x38] sm:$0xff]
        %vm215 = vcmask 261120
        %v217 = vsel %vm215, %v199, 0
        %v220 = vsel %vm215, %v200, 0
        %v223 = vsel %vm215, %v201, 0
        %v226 = vsel %vm215, %v202, 0
        %v229 = vsel %vm215, %v203, 0
        %v232 = vsel %vm215, %v204, 0
        %v235 = vsel %vm215, %v205, 0
        %v238 = vsel %vm215, %v206, 0
        %240 = vmatprep.subr.mxu0 %v208
        %241 = vmatpush1.msra.mxu0 %v207
        %242 = vmatprep.subr.mxu0 %v210
        %243 = vmatpush1.msra.mxu0 %v209
        %244 = vmatprep.subr.mxu0 %v212
        %245 = vmatpush1.msra.mxu0 %v211
        %246 = vmatprep.subr.mxu0 %v214
        %247 = vmatpush1.msra.mxu0 %v213
        %248 = vmatprep.subr.mxu0 0.0
        %249 = vmatpush1.msra.mxu0 0.0
        %250 = vmatprep.subr.mxu0 0.0
        %251 = vmatpush1.msra.mxu0 0.0
        %252 = vmatprep.subr.mxu0 0.0
        %253 = vmatpush1.msra.mxu0 0.0
        %254 = vmatprep.subr.mxu0 0.0
        %255 = vmatpush1.msra.mxu0 0.0
        %256 = vmatprep.subr.mxu0 0.0
        %257 = vmatpush1.msra.mxu0 0.0
        %258 = vmatprep.subr.mxu0 0.0
        %259 = vmatpush1.msra.mxu0 0.0
        %260 = vmatprep.subr.mxu0 0.0
        %261 = vmatpush1.msra.mxu0 0.0
        %262 = vmatprep.subr.mxu0 0.0
        %263 = vmatpush1.msra.mxu0 0.0
        %264 = vmatprep.subr.mxu0 0.0
        %265 = vmatpush1.msra.mxu0 0.0
        %266 = vmatprep.subr.mxu0 0.0
        %267 = vmatpush1.msra.mxu0 0.0
        %268 = vmatprep.subr.mxu0 0.0
        %269 = vmatpush1.msra.mxu0 0.0
        %270 = vmatprep.subr.mxu0 0.0
        %271 = vmatpush1.msra.mxu0 0.0
        %272 = vmatprep.subr.mxu0 0.0
        %273 = vmatpush1.msra.mxu0 0.0
        %274 = vmatprep.subr.mxu0 0.0
        %275 = vmatpush1.msra.mxu0 0.0
        %276 = vmatprep.subr.mxu0 0.0
        %277 = vmatpush1.msra.mxu0 0.0
        %278 = vmatprep.subr.mxu0 0.0
        %279 = vmatpush1.msra.mxu0 0.0
        %280 = vmatprep.subr.mxu0 0.0
        %281 = vmatpush1.msra.mxu0 0.0
        %282 = vmatprep.subr.mxu0 0.0
        %283 = vmatpush1.msra.mxu0 0.0
        %284 = vmatprep.subr.mxu0 0.0
        %285 = vmatpush1.msra.mxu0 0.0
        %286 = vmatprep.subr.mxu0 0.0
        %287 = vmatpush1.msra.mxu0 0.0
        %288 = vmatprep.subr.mxu0 0.0
        %289 = vmatpush1.msra.mxu0 0.0
        %290 = vmatprep.subr.mxu0 0.0
        %291 = vmatpush1.msra.mxu0 0.0
        %292 = vmatprep.subr.mxu0 0.0
        %293 = vmatpush1.msra.mxu0 0.0
        %294 = vmatprep.subr.mxu0 0.0
        %295 = vmatpush1.msra.mxu0 0.0
        %296 = vmatprep.subr.mxu0 0.0
        %297 = vmatpush1.msra.mxu0 0.0
        %298 = vmatprep.subr.mxu0 0.0
        %299 = vmatpush1.msra.mxu0 0.0
        %300 = vmatprep.subr.mxu0 0.0
        %301 = vmatpush1.msra.mxu0 0.0
        %302 = vmatprep.subr.mxu0 0.0
        %303 = vmatpush1.msra.mxu0 0.0
        %304 = vmatprep.mubr.f32.mxu0 0.0
        %305 = vmatmul.mubr.f32.gmra.mrb[0].mxu0 %v217
        %v306 = vpop.f32.mrb[0].mxu0
        %v307 = vadd.f32 0.0, %v306
        %v308 = vpop.f32.mrb[0].mxu0
        %v309 = vadd.f32 0.0, %v308
        %310 = vmatprep.mubr.f32.mxu0 0.0
        %311 = vmatmul.mubr.f32.gmra.mrb[0].mxu0 %v220
        %v312 = vpop.f32.mrb[0].mxu0
        %v313 = vadd.f32 0.0, %v312
        %v314 = vpop.f32.mrb[0].mxu0
        %v315 = vadd.f32 0.0, %v314
        %316 = vmatprep.mubr.f32.mxu0 0.0
        %317 = vmatmul.mubr.f32.gmra.mrb[0].mxu0 %v223
        %v318 = vpop.f32.mrb[0].mxu0
        %v319 = vadd.f32 0.0, %v318
        %v320 = vpop.f32.mrb[0].mxu0
        %v321 = vadd.f32 0.0, %v320
        %322 = vmatprep.mubr.f32.mxu0 0.0
        %323 = vmatmul.mubr.f32.gmra.mrb[0].mxu0 %v226
        %v324 = vpop.f32.mrb[0].mxu0
        %v325 = vadd.f32 0.0, %v324
        %v326 = vpop.f32.mrb[0].mxu0
        %v327 = vadd.f32 0.0, %v326
        %328 = vmatprep.mubr.f32.mxu0 0.0
        %329 = vmatmul.mubr.f32.gmra.mrb[0].mxu0 %v229
        %v330 = vpop.f32.mrb[0].mxu0
        %v331 = vadd.f32 0.0, %v330
        %v332 = vpop.f32.mrb[0].mxu0
        %v333 = vadd.f32 0.0, %v332
        %334 = vmatprep.mubr.f32.mxu0 0.0
        %335 = vmatmul.mubr.f32.gmra.mrb[0].mxu0 %v232
        %v336 = vpop.f32.mrb[0].mxu0
        %v337 = vadd.f32 0.0, %v336
        %v338 = vpop.f32.mrb[0].mxu0
        %v339 = vadd.f32 0.0, %v338
        %340 = vmatprep.mubr.f32.mxu0 0.0
        %341 = vmatmul.mubr.f32.gmra.mrb[0].mxu0 %v235
        %v342 = vpop.f32.mrb[0].mxu0
        %v343 = vadd.f32 0.0, %v342
        %v344 = vpop.f32.mrb[0].mxu0
        %v345 = vadd.f32 0.0, %v344
        %346 = vmatprep.mubr.f32.mxu0 0.0
        %347 = vmatmul.mubr.f32.gmra.mrb[0].mxu0 %v238
        %v348 = vpop.f32.mrb[0].mxu0
        %v349 = vadd.f32 0.0, %v348
        %v350 = vpop.f32.mrb[0].mxu0
        %v351 = vadd.f32 0.0, %v350
        %352 = vdwg.mxu0
        %v353 = vld [vmem:[%s2] sm:$0xff]
        %v354 = vld [vmem:[%s2 + $0x8] sm:$0xff]
        %v355 = vld [vmem:[%s2 + $0x10] sm:$0xff]
        %v356 = vld [vmem:[%s2 + $0x18] sm:$0xff]
        %v357 = vld [vmem:[%s2 + $0x20] sm:$0xff]
        %v358 = vld [vmem:[%s2 + $0x28] sm:$0xff]
        %v359 = vld [vmem:[%s2 + $0x30] sm:$0xff]
        %v360 = vld [vmem:[%s2 + $0x38] sm:$0xff]
        %v361 = vld [vmem:[%s3] sm:$0xff]
        %v362 = vld [vmem:[%s3 + $0x8] sm:$0xff]
        %v363 = vld [vmem:[%s3 + $0x10] sm:$0xff]
        %v364 = vld [vmem:[%s3 + $0x18] sm:$0xff]
        %v365 = vld [vmem:[%s3 + $0x20] sm:$0xff]
        %v366 = vld [vmem:[%s3 + $0x28] sm:$0xff]
        %v367 = vld [vmem:[%s3 + $0x30] sm:$0xff]
        %v368 = vld [vmem:[%s3 + $0x38] sm:$0xff]
        %v369 = vmul.f32 %v353, %v307
        %v370 = vmul.f32 %v354, %v313
        %v371 = vmul.f32 %v355, %v319
        %v372 = vmul.f32 %v356, %v325
        %v373 = vmul.f32 %v357, %v331
        %v374 = vmul.f32 %v358, %v337
        %v375 = vmul.f32 %v359, %v343
        %v376 = vmul.f32 %v360, %v349
        %385 = vrot.lane.b32.xlu0 %v307, 96
        %v386 = vpop.permute.xlu0 %385
        %387 = vrot.lane.b32.xlu0 %v313, 96
        %v388 = vpop.permute.xlu0 %387
        %389 = vrot.lane.b32.xlu0 %v319, 96
        %v390 = vpop.permute.xlu0 %389
        %391 = vrot.lane.b32.xlu0 %v325, 96
        %v392 = vpop.permute.xlu0 %391
        %393 = vrot.lane.b32.xlu0 %v331, 96
        %v394 = vpop.permute.xlu0 %393
        %395 = vrot.lane.b32.xlu0 %v337, 96
        %v396 = vpop.permute.xlu0 %395
        %397 = vrot.lane.b32.xlu0 %v343, 96
        %v398 = vpop.permute.xlu0 %397
        %399 = vrot.lane.b32.xlu0 %v349, 96
        %v400 = vpop.permute.xlu0 %399
        %v409 = vmul.f32 %v361, %v386
        %v410 = vmul.f32 %v362, %v388
        %v411 = vmul.f32 %v363, %v390
        %v412 = vmul.f32 %v364, %v392
        %v413 = vmul.f32 %v365, %v394
        %v414 = vmul.f32 %v366, %v396
        %v415 = vmul.f32 %v367, %v398
        %v416 = vmul.f32 %v368, %v400
        %v417 = vadd.f32 %v369, %v409
        %v418 = vadd.f32 %v370, %v410
        %v419 = vadd.f32 %v371, %v411
        %v420 = vadd.f32 %v372, %v412
        %v421 = vadd.f32 %v373, %v413
        %v422 = vadd.f32 %v374, %v414
        %v423 = vadd.f32 %v375, %v415
        %v424 = vadd.f32 %v376, %v416
        %425 = vrot.lane.b32.xlu0 %v307, 64
        %v426 = vpop.permute.xlu0 %425
        %427 = vrot.lane.b32.xlu0 %v313, 64
        %v428 = vpop.permute.xlu0 %427
        %429 = vrot.lane.b32.xlu0 %v319, 64
        %v430 = vpop.permute.xlu0 %429
        %431 = vrot.lane.b32.xlu0 %v325, 64
        %v432 = vpop.permute.xlu0 %431
        %433 = vrot.lane.b32.xlu0 %v331, 64
        %v434 = vpop.permute.xlu0 %433
        %435 = vrot.lane.b32.xlu0 %v337, 64
        %v436 = vpop.permute.xlu0 %435
        %437 = vrot.lane.b32.xlu0 %v343, 64
        %v438 = vpop.permute.xlu0 %437
        %439 = vrot.lane.b32.xlu0 %v349, 64
        %v440 = vpop.permute.xlu0 %439
        %v449 = vmul.f32 %v353, %v426
        %v450 = vmul.f32 %v354, %v428
        %v451 = vmul.f32 %v355, %v430
        %v452 = vmul.f32 %v356, %v432
        %v453 = vmul.f32 %v357, %v434
        %v454 = vmul.f32 %v358, %v436
        %v455 = vmul.f32 %v359, %v438
        %v456 = vmul.f32 %v360, %v440
        %457 = vrot.lane.b32.xlu0 %v307, 32
        %v458 = vpop.permute.xlu0 %457
        %459 = vrot.lane.b32.xlu0 %v313, 32
        %v460 = vpop.permute.xlu0 %459
        %461 = vrot.lane.b32.xlu0 %v319, 32
        %v462 = vpop.permute.xlu0 %461
        %463 = vrot.lane.b32.xlu0 %v325, 32
        %v464 = vpop.permute.xlu0 %463
        %465 = vrot.lane.b32.xlu0 %v331, 32
        %v466 = vpop.permute.xlu0 %465
        %467 = vrot.lane.b32.xlu0 %v337, 32
        %v468 = vpop.permute.xlu0 %467
        %469 = vrot.lane.b32.xlu0 %v343, 32
        %v470 = vpop.permute.xlu0 %469
        %471 = vrot.lane.b32.xlu0 %v349, 32
        %v472 = vpop.permute.xlu0 %471
        %v481 = vmul.f32 %v361, %v458
        %v482 = vmul.f32 %v362, %v460
        %v483 = vmul.f32 %v363, %v462
        %v484 = vmul.f32 %v364, %v464
        %v485 = vmul.f32 %v365, %v466
        %v486 = vmul.f32 %v366, %v468
        %v487 = vmul.f32 %v367, %v470
        %v488 = vmul.f32 %v368, %v472
        %v489 = vadd.f32 %v449, %v481
        %v490 = vadd.f32 %v450, %v482
        %v491 = vadd.f32 %v451, %v483
        %v492 = vadd.f32 %v452, %v484
        %v493 = vadd.f32 %v453, %v485
        %v494 = vadd.f32 %v454, %v486
        %v495 = vadd.f32 %v455, %v487
        %v496 = vadd.f32 %v456, %v488
        %v498 = vsel %vm215, %v417, 0
        %v501 = vsel %vm215, %v489, 0
        %503 = vmatprep.subr.mxu0 0.0
        %504 = vmatpush1.xpose.msra.mxu0 %v501
        %505 = vmatprep.subr.mxu0 0.0
        %506 = vmatpush1.xpose.msra.mxu0 0.0
        %507 = vmatprep.subr.mxu0 0.0
        %508 = vmatpush1.xpose.msra.mxu0 0.0
        %509 = vmatprep.subr.mxu0 0.0
        %510 = vmatpush1.xpose.msra.mxu0 0.0
        %511 = vmatprep.subr.mxu0 0.0
        %512 = vmatpush1.xpose.msra.mxu0 0.0
        %513 = vmatprep.subr.mxu0 0.0
        %514 = vmatpush1.xpose.msra.mxu0 0.0
        %515 = vmatprep.subr.mxu0 0.0
        %516 = vmatpush1.xpose.msra.mxu0 0.0
        %517 = vmatprep.subr.mxu0 0.0
        %518 = vmatpush1.xpose.msra.mxu0 0.0
        %519 = vmatprep.subr.mxu0 0.0
        %520 = vmatpush1.xpose.msra.mxu0 0.0
        %521 = vmatprep.subr.mxu0 0.0
        %522 = vmatpush1.xpose.msra.mxu0 0.0
        %523 = vmatprep.subr.mxu0 0.0
        %524 = vmatpush1.xpose.msra.mxu0 0.0
        %525 = vmatprep.subr.mxu0 0.0
        %526 = vmatpush1.xpose.msra.mxu0 0.0
        %527 = vmatprep.subr.mxu0 0.0
        %528 = vmatpush1.xpose.msra.mxu0 0.0
        %529 = vmatprep.subr.mxu0 0.0
        %530 = vmatpush1.xpose.msra.mxu0 0.0
        %531 = vmatprep.subr.mxu0 0.0
        %532 = vmatpush1.xpose.msra.mxu0 0.0
        %533 = vmatprep.subr.mxu0 0.0
        %534 = vmatpush1.xpose.msra.mxu0 0.0
        %535 = vmatprep.subr.mxu0 0.0
        %536 = vmatpush1.xpose.msra.mxu0 0.0
        %537 = vmatprep.subr.mxu0 0.0
        %538 = vmatpush1.xpose.msra.mxu0 0.0
        %539 = vmatprep.subr.mxu0 0.0
        %540 = vmatpush1.xpose.msra.mxu0 0.0
        %541 = vmatprep.subr.mxu0 0.0
        %542 = vmatpush1.xpose.msra.mxu0 0.0
        %543 = vmatprep.subr.mxu0 0.0
        %544 = vmatpush1.xpose.msra.mxu0 0.0
        %545 = vmatprep.subr.mxu0 0.0
        %546 = vmatpush1.xpose.msra.mxu0 0.0
        %547 = vmatprep.subr.mxu0 0.0
        %548 = vmatpush1.xpose.msra.mxu0 0.0
        %549 = vmatprep.subr.mxu0 0.0
        %550 = vmatpush1.xpose.msra.mxu0 0.0
        %551 = vmatprep.subr.mxu0 0.0
        %552 = vmatpush1.xpose.msra.mxu0 0.0
        %553 = vmatprep.subr.mxu0 0.0
        %554 = vmatpush1.xpose.msra.mxu0 0.0
        %555 = vmatprep.subr.mxu0 0.0
        %556 = vmatpush1.xpose.msra.mxu0 0.0
        %557 = vmatprep.subr.mxu0 0.0
        %558 = vmatpush1.xpose.msra.mxu0 0.0
        %559 = vmatprep.subr.mxu0 0.0
        %560 = vmatpush1.xpose.msra.mxu0 0.0
        %561 = vmatprep.subr.mxu0 0.0
        %562 = vmatpush1.xpose.msra.mxu0 0.0
        %563 = vmatprep.subr.mxu0 0.0
        %564 = vmatpush1.xpose.msra.mxu0 0.0
        %565 = vmatprep.subr.mxu0 0.0
        %566 = vmatpush1.xpose.msra.mxu0 0.0
        %567 = vmatprep.mubr.f32.mxu0 0.0
        %568 = vmatmul.mubr.f32.gmra.mrb[0].mxu0 %v498
        %v569 = vpop.f32.mrb[0].mxu0
        %v570 = vadd.f32 0.0, %v569
        %v571 = vpop.f32.mrb[0].mxu0
        %572 = vdwg.mxu0
        %v574 = vsel %vm215, %v418, 0
        %v577 = vsel %vm215, %v490, 0
        %579 = vmatprep.subr.mxu0 0.0
        %580 = vmatpush1.xpose.msra.mxu0 %v577
        %581 = vmatprep.subr.mxu0 0.0
        %582 = vmatpush1.xpose.msra.mxu0 0.0
        %583 = vmatprep.subr.mxu0 0.0
        %584 = vmatpush1.xpose.msra.mxu0 0.0
        %585 = vmatprep.subr.mxu0 0.0
        %586 = vmatpush1.xpose.msra.mxu0 0.0
        %587 = vmatprep.subr.mxu0 0.0
        %588 = vmatpush1.xpose.msra.mxu0 0.0
        %589 = vmatprep.subr.mxu0 0.0
        %590 = vmatpush1.xpose.msra.mxu0 0.0
        %591 = vmatprep.subr.mxu0 0.0
        %592 = vmatpush1.xpose.msra.mxu0 0.0
        %593 = vmatprep.subr.mxu0 0.0
        %594 = vmatpush1.xpose.msra.mxu0 0.0
        %595 = vmatprep.subr.mxu0 0.0
        %596 = vmatpush1.xpose.msra.mxu0 0.0
        %597 = vmatprep.subr.mxu0 0.0
        %598 = vmatpush1.xpose.msra.mxu0 0.0
        %599 = vmatprep.subr.mxu0 0.0
        %600 = vmatpush1.xpose.msra.mxu0 0.0
        %601 = vmatprep.subr.mxu0 0.0
        %602 = vmatpush1.xpose.msra.mxu0 0.0
        %603 = vmatprep.subr.mxu0 0.0
        %604 = vmatpush1.xpose.msra.mxu0 0.0
        %605 = vmatprep.subr.mxu0 0.0
        %606 = vmatpush1.xpose.msra.mxu0 0.0
        %607 = vmatprep.subr.mxu0 0.0
        %608 = vmatpush1.xpose.msra.mxu0 0.0
        %609 = vmatprep.subr.mxu0 0.0
        %610 = vmatpush1.xpose.msra.mxu0 0.0
        %611 = vmatprep.subr.mxu0 0.0
        %612 = vmatpush1.xpose.msra.mxu0 0.0
        %613 = vmatprep.subr.mxu0 0.0
        %614 = vmatpush1.xpose.msra.mxu0 0.0
        %615 = vmatprep.subr.mxu0 0.0
        %616 = vmatpush1.xpose.msra.mxu0 0.0
        %617 = vmatprep.subr.mxu0 0.0
        %618 = vmatpush1.xpose.msra.mxu0 0.0
        %619 = vmatprep.subr.mxu0 0.0
        %620 = vmatpush1.xpose.msra.mxu0 0.0
        %621 = vmatprep.subr.mxu0 0.0
        %622 = vmatpush1.xpose.msra.mxu0 0.0
        %623 = vmatprep.subr.mxu0 0.0
        %624 = vmatpush1.xpose.msra.mxu0 0.0
        %625 = vmatprep.subr.mxu0 0.0
        %626 = vmatpush1.xpose.msra.mxu0 0.0
        %627 = vmatprep.subr.mxu0 0.0
        %628 = vmatpush1.xpose.msra.mxu0 0.0
        %629 = vmatprep.subr.mxu0 0.0
        %630 = vmatpush1.xpose.msra.mxu0 0.0
        %631 = vmatprep.subr.mxu0 0.0
        %632 = vmatpush1.xpose.msra.mxu0 0.0
        %633 = vmatprep.subr.mxu0 0.0
        %634 = vmatpush1.xpose.msra.mxu0 0.0
        %635 = vmatprep.subr.mxu0 0.0
        %636 = vmatpush1.xpose.msra.mxu0 0.0
        %637 = vmatprep.subr.mxu0 0.0
        %638 = vmatpush1.xpose.msra.mxu0 0.0
        %639 = vmatprep.subr.mxu0 0.0
        %640 = vmatpush1.xpose.msra.mxu0 0.0
        %641 = vmatprep.subr.mxu0 0.0
        %642 = vmatpush1.xpose.msra.mxu0 0.0
        %643 = vmatprep.mubr.f32.mxu0 0.0
        %644 = vmatmul.mubr.f32.gmra.mrb[0].mxu0 %v574
        %v645 = vpop.f32.mrb[0].mxu0
        %v646 = vadd.f32 0.0, %v645
        %v647 = vpop.f32.mrb[0].mxu0
        %648 = vdwg.mxu0
        %v650 = vsel %vm215, %v419, 0
        %v653 = vsel %vm215, %v491, 0
        %655 = vmatprep.subr.mxu0 0.0
        %656 = vmatpush1.xpose.msra.mxu0 %v653
        %657 = vmatprep.subr.mxu0 0.0
        %658 = vmatpush1.xpose.msra.mxu0 0.0
        %659 = vmatprep.subr.mxu0 0.0
        %660 = vmatpush1.xpose.msra.mxu0 0.0
        %661 = vmatprep.subr.mxu0 0.0
        %662 = vmatpush1.xpose.msra.mxu0 0.0
        %663 = vmatprep.subr.mxu0 0.0
        %664 = vmatpush1.xpose.msra.mxu0 0.0
        %665 = vmatprep.subr.mxu0 0.0
        %666 = vmatpush1.xpose.msra.mxu0 0.0
        %667 = vmatprep.subr.mxu0 0.0
        %668 = vmatpush1.xpose.msra.mxu0 0.0
        %669 = vmatprep.subr.mxu0 0.0
        %670 = vmatpush1.xpose.msra.mxu0 0.0
        %671 = vmatprep.subr.mxu0 0.0
        %672 = vmatpush1.xpose.msra.mxu0 0.0
        %673 = vmatprep.subr.mxu0 0.0
        %674 = vmatpush1.xpose.msra.mxu0 0.0
        %675 = vmatprep.subr.mxu0 0.0
        %676 = vmatpush1.xpose.msra.mxu0 0.0
        %677 = vmatprep.subr.mxu0 0.0
        %678 = vmatpush1.xpose.msra.mxu0 0.0
        %679 = vmatprep.subr.mxu0 0.0
        %680 = vmatpush1.xpose.msra.mxu0 0.0
        %681 = vmatprep.subr.mxu0 0.0
        %682 = vmatpush1.xpose.msra.mxu0 0.0
        %683 = vmatprep.subr.mxu0 0.0
        %684 = vmatpush1.xpose.msra.mxu0 0.0
        %685 = vmatprep.subr.mxu0 0.0
        %686 = vmatpush1.xpose.msra.mxu0 0.0
        %687 = vmatprep.subr.mxu0 0.0
        %688 = vmatpush1.xpose.msra.mxu0 0.0
        %689 = vmatprep.subr.mxu0 0.0
        %690 = vmatpush1.xpose.msra.mxu0 0.0
        %691 = vmatprep.subr.mxu0 0.0
        %692 = vmatpush1.xpose.msra.mxu0 0.0
        %693 = vmatprep.subr.mxu0 0.0
        %694 = vmatpush1.xpose.msra.mxu0 0.0
        %695 = vmatprep.subr.mxu0 0.0
        %696 = vmatpush1.xpose.msra.mxu0 0.0
        %697 = vmatprep.subr.mxu0 0.0
        %698 = vmatpush1.xpose.msra.mxu0 0.0
        %699 = vmatprep.subr.mxu0 0.0
        %700 = vmatpush1.xpose.msra.mxu0 0.0
        %701 = vmatprep.subr.mxu0 0.0
        %702 = vmatpush1.xpose.msra.mxu0 0.0
        %703 = vmatprep.subr.mxu0 0.0
        %704 = vmatpush1.xpose.msra.mxu0 0.0
        %705 = vmatprep.subr.mxu0 0.0
        %706 = vmatpush1.xpose.msra.mxu0 0.0
        %707 = vmatprep.subr.mxu0 0.0
        %708 = vmatpush1.xpose.msra.mxu0 0.0
        %709 = vmatprep.subr.mxu0 0.0
        %710 = vmatpush1.xpose.msra.mxu0 0.0
        %711 = vmatprep.subr.mxu0 0.0
        %712 = vmatpush1.xpose.msra.mxu0 0.0
        %713 = vmatprep.subr.mxu0 0.0
        %714 = vmatpush1.xpose.msra.mxu0 0.0
        %715 = vmatprep.subr.mxu0 0.0
        %716 = vmatpush1.xpose.msra.mxu0 0.0
        %717 = vmatprep.subr.mxu0 0.0
        %718 = vmatpush1.xpose.msra.mxu0 0.0
        %719 = vmatprep.mubr.f32.mxu0 0.0
        %720 = vmatmul.mubr.f32.gmra.mrb[0].mxu0 %v650
        %v721 = vpop.f32.mrb[0].mxu0
        %v722 = vadd.f32 0.0, %v721
        %v723 = vpop.f32.mrb[0].mxu0
        %724 = vdwg.mxu0
        %v726 = vsel %vm215, %v420, 0
        %v729 = vsel %vm215, %v492, 0
        %731 = vmatprep.subr.mxu0 0.0
        %732 = vmatpush1.xpose.msra.mxu0 %v729
        %733 = vmatprep.subr.mxu0 0.0
        %734 = vmatpush1.xpose.msra.mxu0 0.0
        %735 = vmatprep.subr.mxu0 0.0
        %736 = vmatpush1.xpose.msra.mxu0 0.0
        %737 = vmatprep.subr.mxu0 0.0
        %738 = vmatpush1.xpose.msra.mxu0 0.0
        %739 = vmatprep.subr.mxu0 0.0
        %740 = vmatpush1.xpose.msra.mxu0 0.0
        %741 = vmatprep.subr.mxu0 0.0
        %742 = vmatpush1.xpose.msra.mxu0 0.0
        %743 = vmatprep.subr.mxu0 0.0
        %744 = vmatpush1.xpose.msra.mxu0 0.0
        %745 = vmatprep.subr.mxu0 0.0
        %746 = vmatpush1.xpose.msra.mxu0 0.0
        %747 = vmatprep.subr.mxu0 0.0
        %748 = vmatpush1.xpose.msra.mxu0 0.0
        %749 = vmatprep.subr.mxu0 0.0
        %750 = vmatpush1.xpose.msra.mxu0 0.0
        %751 = vmatprep.subr.mxu0 0.0
        %752 = vmatpush1.xpose.msra.mxu0 0.0
        %753 = vmatprep.subr.mxu0 0.0
        %754 = vmatpush1.xpose.msra.mxu0 0.0
        %755 = vmatprep.subr.mxu0 0.0
        %756 = vmatpush1.xpose.msra.mxu0 0.0
        %757 = vmatprep.subr.mxu0 0.0
        %758 = vmatpush1.xpose.msra.mxu0 0.0
        %759 = vmatprep.subr.mxu0 0.0
        %760 = vmatpush1.xpose.msra.mxu0 0.0
        %761 = vmatprep.subr.mxu0 0.0
        %762 = vmatpush1.xpose.msra.mxu0 0.0
        %763 = vmatprep.subr.mxu0 0.0
        %764 = vmatpush1.xpose.msra.mxu0 0.0
        %765 = vmatprep.subr.mxu0 0.0
        %766 = vmatpush1.xpose.msra.mxu0 0.0
        %767 = vmatprep.subr.mxu0 0.0
        %768 = vmatpush1.xpose.msra.mxu0 0.0
        %769 = vmatprep.subr.mxu0 0.0
        %770 = vmatpush1.xpose.msra.mxu0 0.0
        %771 = vmatprep.subr.mxu0 0.0
        %772 = vmatpush1.xpose.msra.mxu0 0.0
        %773 = vmatprep.subr.mxu0 0.0
        %774 = vmatpush1.xpose.msra.mxu0 0.0
        %775 = vmatprep.subr.mxu0 0.0
        %776 = vmatpush1.xpose.msra.mxu0 0.0
        %777 = vmatprep.subr.mxu0 0.0
        %778 = vmatpush1.xpose.msra.mxu0 0.0
        %779 = vmatprep.subr.mxu0 0.0
        %780 = vmatpush1.xpose.msra.mxu0 0.0
        %781 = vmatprep.subr.mxu0 0.0
        %782 = vmatpush1.xpose.msra.mxu0 0.0
        %783 = vmatprep.subr.mxu0 0.0
        %784 = vmatpush1.xpose.msra.mxu0 0.0
        %785 = vmatprep.subr.mxu0 0.0
        %786 = vmatpush1.xpose.msra.mxu0 0.0
        %787 = vmatprep.subr.mxu0 0.0
        %788 = vmatpush1.xpose.msra.mxu0 0.0
        %789 = vmatprep.subr.mxu0 0.0
        %790 = vmatpush1.xpose.msra.mxu0 0.0
        %791 = vmatprep.subr.mxu0 0.0
        %792 = vmatpush1.xpose.msra.mxu0 0.0
        %793 = vmatprep.subr.mxu0 0.0
        %794 = vmatpush1.xpose.msra.mxu0 0.0
        %795 = vmatprep.mubr.f32.mxu0 0.0
        %796 = vmatmul.mubr.f32.gmra.mrb[0].mxu0 %v726
        %v797 = vpop.f32.mrb[0].mxu0
        %v798 = vadd.f32 0.0, %v797
        %v799 = vpop.f32.mrb[0].mxu0
        %800 = vdwg.mxu0
        %v802 = vsel %vm215, %v421, 0
        %v805 = vsel %vm215, %v493, 0
        %807 = vmatprep.subr.mxu0 0.0
        %808 = vmatpush1.xpose.msra.mxu0 %v805
        %809 = vmatprep.subr.mxu0 0.0
        %810 = vmatpush1.xpose.msra.mxu0 0.0
        %811 = vmatprep.subr.mxu0 0.0
        %812 = vmatpush1.xpose.msra.mxu0 0.0
        %813 = vmatprep.subr.mxu0 0.0
        %814 = vmatpush1.xpose.msra.mxu0 0.0
        %815 = vmatprep.subr.mxu0 0.0
        %816 = vmatpush1.xpose.msra.mxu0 0.0
        %817 = vmatprep.subr.mxu0 0.0
        %818 = vmatpush1.xpose.msra.mxu0 0.0
        %819 = vmatprep.subr.mxu0 0.0
        %820 = vmatpush1.xpose.msra.mxu0 0.0
        %821 = vmatprep.subr.mxu0 0.0
        %822 = vmatpush1.xpose.msra.mxu0 0.0
        %823 = vmatprep.subr.mxu0 0.0
        %824 = vmatpush1.xpose.msra.mxu0 0.0
        %825 = vmatprep.subr.mxu0 0.0
        %826 = vmatpush1.xpose.msra.mxu0 0.0
        %827 = vmatprep.subr.mxu0 0.0
        %828 = vmatpush1.xpose.msra.mxu0 0.0
        %829 = vmatprep.subr.mxu0 0.0
        %830 = vmatpush1.xpose.msra.mxu0 0.0
        %831 = vmatprep.subr.mxu0 0.0
        %832 = vmatpush1.xpose.msra.mxu0 0.0
        %833 = vmatprep.subr.mxu0 0.0
        %834 = vmatpush1.xpose.msra.mxu0 0.0
        %835 = vmatprep.subr.mxu0 0.0
        %836 = vmatpush1.xpose.msra.mxu0 0.0
        %837 = vmatprep.subr.mxu0 0.0
        %838 = vmatpush1.xpose.msra.mxu0 0.0
        %839 = vmatprep.subr.mxu0 0.0
        %840 = vmatpush1.xpose.msra.mxu0 0.0
        %841 = vmatprep.subr.mxu0 0.0
        %842 = vmatpush1.xpose.msra.mxu0 0.0
        %843 = vmatprep.subr.mxu0 0.0
        %844 = vmatpush1.xpose.msra.mxu0 0.0
        %845 = vmatprep.subr.mxu0 0.0
        %846 = vmatpush1.xpose.msra.mxu0 0.0
        %847 = vmatprep.subr.mxu0 0.0
        %848 = vmatpush1.xpose.msra.mxu0 0.0
        %849 = vmatprep.subr.mxu0 0.0
        %850 = vmatpush1.xpose.msra.mxu0 0.0
        %851 = vmatprep.subr.mxu0 0.0
        %852 = vmatpush1.xpose.msra.mxu0 0.0
        %853 = vmatprep.subr.mxu0 0.0
        %854 = vmatpush1.xpose.msra.mxu0 0.0
        %855 = vmatprep.subr.mxu0 0.0
        %856 = vmatpush1.xpose.msra.mxu0 0.0
        %857 = vmatprep.subr.mxu0 0.0
        %858 = vmatpush1.xpose.msra.mxu0 0.0
        %859 = vmatprep.subr.mxu0 0.0
        %860 = vmatpush1.xpose.msra.mxu0 0.0
        %861 = vmatprep.subr.mxu0 0.0
        %862 = vmatpush1.xpose.msra.mxu0 0.0
        %863 = vmatprep.subr.mxu0 0.0
        %864 = vmatpush1.xpose.msra.mxu0 0.0
        %865 = vmatprep.subr.mxu0 0.0
        %866 = vmatpush1.xpose.msra.mxu0 0.0
        %867 = vmatprep.subr.mxu0 0.0
        %868 = vmatpush1.xpose.msra.mxu0 0.0
        %869 = vmatprep.subr.mxu0 0.0
        %870 = vmatpush1.xpose.msra.mxu0 0.0
        %871 = vmatprep.mubr.f32.mxu0 0.0
        %872 = vmatmul.mubr.f32.gmra.mrb[0].mxu0 %v802
        %v873 = vpop.f32.mrb[0].mxu0
        %v874 = vadd.f32 0.0, %v873
        %v875 = vpop.f32.mrb[0].mxu0
        %876 = vdwg.mxu0
        %v878 = vsel %vm215, %v422, 0
        %v881 = vsel %vm215, %v494, 0
        %883 = vmatprep.subr.mxu0 0.0
        %884 = vmatpush1.xpose.msra.mxu0 %v881
        %885 = vmatprep.subr.mxu0 0.0
        %886 = vmatpush1.xpose.msra.mxu0 0.0
        %887 = vmatprep.subr.mxu0 0.0
        %888 = vmatpush1.xpose.msra.mxu0 0.0
        %889 = vmatprep.subr.mxu0 0.0
        %890 = vmatpush1.xpose.msra.mxu0 0.0
        %891 = vmatprep.subr.mxu0 0.0
        %892 = vmatpush1.xpose.msra.mxu0 0.0
        %893 = vmatprep.subr.mxu0 0.0
        %894 = vmatpush1.xpose.msra.mxu0 0.0
        %895 = vmatprep.subr.mxu0 0.0
        %896 = vmatpush1.xpose.msra.mxu0 0.0
        %897 = vmatprep.subr.mxu0 0.0
        %898 = vmatpush1.xpose.msra.mxu0 0.0
        %899 = vmatprep.subr.mxu0 0.0
        %900 = vmatpush1.xpose.msra.mxu0 0.0
        %901 = vmatprep.subr.mxu0 0.0
        %902 = vmatpush1.xpose.msra.mxu0 0.0
        %903 = vmatprep.subr.mxu0 0.0
        %904 = vmatpush1.xpose.msra.mxu0 0.0
        %905 = vmatprep.subr.mxu0 0.0
        %906 = vmatpush1.xpose.msra.mxu0 0.0
        %907 = vmatprep.subr.mxu0 0.0
        %908 = vmatpush1.xpose.msra.mxu0 0.0
        %909 = vmatprep.subr.mxu0 0.0
        %910 = vmatpush1.xpose.msra.mxu0 0.0
        %911 = vmatprep.subr.mxu0 0.0
        %912 = vmatpush1.xpose.msra.mxu0 0.0
        %913 = vmatprep.subr.mxu0 0.0
        %914 = vmatpush1.xpose.msra.mxu0 0.0
        %915 = vmatprep.subr.mxu0 0.0
        %916 = vmatpush1.xpose.msra.mxu0 0.0
        %917 = vmatprep.subr.mxu0 0.0
        %918 = vmatpush1.xpose.msra.mxu0 0.0
        %919 = vmatprep.subr.mxu0 0.0
        %920 = vmatpush1.xpose.msra.mxu0 0.0
        %921 = vmatprep.subr.mxu0 0.0
        %922 = vmatpush1.xpose.msra.mxu0 0.0
        %923 = vmatprep.subr.mxu0 0.0
        %924 = vmatpush1.xpose.msra.mxu0 0.0
        %925 = vmatprep.subr.mxu0 0.0
        %926 = vmatpush1.xpose.msra.mxu0 0.0
        %927 = vmatprep.subr.mxu0 0.0
        %928 = vmatpush1.xpose.msra.mxu0 0.0
        %929 = vmatprep.subr.mxu0 0.0
        %930 = vmatpush1.xpose.msra.mxu0 0.0
        %931 = vmatprep.subr.mxu0 0.0
        %932 = vmatpush1.xpose.msra.mxu0 0.0
        %933 = vmatprep.subr.mxu0 0.0
        %934 = vmatpush1.xpose.msra.mxu0 0.0
        %935 = vmatprep.subr.mxu0 0.0
        %936 = vmatpush1.xpose.msra.mxu0 0.0
        %937 = vmatprep.subr.mxu0 0.0
        %938 = vmatpush1.xpose.msra.mxu0 0.0
        %939 = vmatprep.subr.mxu0 0.0
        %940 = vmatpush1.xpose.msra.mxu0 0.0
        %941 = vmatprep.subr.mxu0 0.0
        %942 = vmatpush1.xpose.msra.mxu0 0.0
        %943 = vmatprep.subr.mxu0 0.0
        %944 = vmatpush1.xpose.msra.mxu0 0.0
        %945 = vmatprep.subr.mxu0 0.0
        %946 = vmatpush1.xpose.msra.mxu0 0.0
        %947 = vmatprep.mubr.f32.mxu0 0.0
        %948 = vmatmul.mubr.f32.gmra.mrb[0].mxu0 %v878
        %v949 = vpop.f32.mrb[0].mxu0
        %v950 = vadd.f32 0.0, %v949
        %v951 = vpop.f32.mrb[0].mxu0
        %952 = vdwg.mxu0
        %v954 = vsel %vm215, %v423, 0
        %v957 = vsel %vm215, %v495, 0
        %959 = vmatprep.subr.mxu0 0.0
        %960 = vmatpush1.xpose.msra.mxu0 %v957
        %961 = vmatprep.subr.mxu0 0.0
        %962 = vmatpush1.xpose.msra.mxu0 0.0
        %963 = vmatprep.subr.mxu0 0.0
        %964 = vmatpush1.xpose.msra.mxu0 0.0
        %965 = vmatprep.subr.mxu0 0.0
        %966 = vmatpush1.xpose.msra.mxu0 0.0
        %967 = vmatprep.subr.mxu0 0.0
        %968 = vmatpush1.xpose.msra.mxu0 0.0
        %969 = vmatprep.subr.mxu0 0.0
        %970 = vmatpush1.xpose.msra.mxu0 0.0
        %971 = vmatprep.subr.mxu0 0.0
        %972 = vmatpush1.xpose.msra.mxu0 0.0
        %973 = vmatprep.subr.mxu0 0.0
        %974 = vmatpush1.xpose.msra.mxu0 0.0
        %975 = vmatprep.subr.mxu0 0.0
        %976 = vmatpush1.xpose.msra.mxu0 0.0
        %977 = vmatprep.subr.mxu0 0.0
        %978 = vmatpush1.xpose.msra.mxu0 0.0
        %979 = vmatprep.subr.mxu0 0.0
        %980 = vmatpush1.xpose.msra.mxu0 0.0
        %981 = vmatprep.subr.mxu0 0.0
        %982 = vmatpush1.xpose.msra.mxu0 0.0
        %983 = vmatprep.subr.mxu0 0.0
        %984 = vmatpush1.xpose.msra.mxu0 0.0
        %985 = vmatprep.subr.mxu0 0.0
        %986 = vmatpush1.xpose.msra.mxu0 0.0
        %987 = vmatprep.subr.mxu0 0.0
        %988 = vmatpush1.xpose.msra.mxu0 0.0
        %989 = vmatprep.subr.mxu0 0.0
        %990 = vmatpush1.xpose.msra.mxu0 0.0
        %991 = vmatprep.subr.mxu0 0.0
        %992 = vmatpush1.xpose.msra.mxu0 0.0
        %993 = vmatprep.subr.mxu0 0.0
        %994 = vmatpush1.xpose.msra.mxu0 0.0
        %995 = vmatprep.subr.mxu0 0.0
        %996 = vmatpush1.xpose.msra.mxu0 0.0
        %997 = vmatprep.subr.mxu0 0.0
        %998 = vmatpush1.xpose.msra.mxu0 0.0
        %999 = vmatprep.subr.mxu0 0.0
        %1000 = vmatpush1.xpose.msra.mxu0 0.0
        %1001 = vmatprep.subr.mxu0 0.0
        %1002 = vmatpush1.xpose.msra.mxu0 0.0
        %1003 = vmatprep.subr.mxu0 0.0
        %1004 = vmatpush1.xpose.msra.mxu0 0.0
        %1005 = vmatprep.subr.mxu0 0.0
        %1006 = vmatpush1.xpose.msra.mxu0 0.0
        %1007 = vmatprep.subr.mxu0 0.0
        %1008 = vmatpush1.xpose.msra.mxu0 0.0
        %1009 = vmatprep.subr.mxu0 0.0
        %1010 = vmatpush1.xpose.msra.mxu0 0.0
        %1011 = vmatprep.subr.mxu0 0.0
        %1012 = vmatpush1.xpose.msra.mxu0 0.0
        %1013 = vmatprep.subr.mxu0 0.0
        %1014 = vmatpush1.xpose.msra.mxu0 0.0
        %1015 = vmatprep.subr.mxu0 0.0
        %1016 = vmatpush1.xpose.msra.mxu0 0.0
        %1017 = vmatprep.subr.mxu0 0.0
        %1018 = vmatpush1.xpose.msra.mxu0 0.0
        %1019 = vmatprep.subr.mxu0 0.0
        %1020 = vmatpush1.xpose.msra.mxu0 0.0
        %1021 = vmatprep.subr.mxu0 0.0
        %1022 = vmatpush1.xpose.msra.mxu0 0.0
        %1023 = vmatprep.mubr.f32.mxu0 0.0
        %1024 = vmatmul.mubr.f32.gmra.mrb[0].mxu0 %v954
        %v1025 = vpop.f32.mrb[0].mxu0
        %v1026 = vadd.f32 0.0, %v1025
        %v1027 = vpop.f32.mrb[0].mxu0
        %1028 = vdwg.mxu0
        %v1030 = vsel %vm215, %v424, 0
        %v1033 = vsel %vm215, %v496, 0
        %1035 = vmatprep.subr.mxu0 0.0
        %1036 = vmatpush1.xpose.msra.mxu0 %v1033
        %1037 = vmatprep.subr.mxu0 0.0
        %1038 = vmatpush1.xpose.msra.mxu0 0.0
        %1039 = vmatprep.subr.mxu0 0.0
        %1040 = vmatpush1.xpose.msra.mxu0 0.0
        %1041 = vmatprep.subr.mxu0 0.0
        %1042 = vmatpush1.xpose.msra.mxu0 0.0
        %1043 = vmatprep.subr.mxu0 0.0
        %1044 = vmatpush1.xpose.msra.mxu0 0.0
        %1045 = vmatprep.subr.mxu0 0.0
        %1046 = vmatpush1.xpose.msra.mxu0 0.0
        %1047 = vmatprep.subr.mxu0 0.0
        %1048 = vmatpush1.xpose.msra.mxu0 0.0
        %1049 = vmatprep.subr.mxu0 0.0
        %1050 = vmatpush1.xpose.msra.mxu0 0.0
        %1051 = vmatprep.subr.mxu0 0.0
        %1052 = vmatpush1.xpose.msra.mxu0 0.0
        %1053 = vmatprep.subr.mxu0 0.0
        %1054 = vmatpush1.xpose.msra.mxu0 0.0
        %1055 = vmatprep.subr.mxu0 0.0
        %1056 = vmatpush1.xpose.msra.mxu0 0.0
        %1057 = vmatprep.subr.mxu0 0.0
        %1058 = vmatpush1.xpose.msra.mxu0 0.0
        %1059 = vmatprep.subr.mxu0 0.0
        %1060 = vmatpush1.xpose.msra.mxu0 0.0
        %1061 = vmatprep.subr.mxu0 0.0
        %1062 = vmatpush1.xpose.msra.mxu0 0.0
        %1063 = vmatprep.subr.mxu0 0.0
        %1064 = vmatpush1.xpose.msra.mxu0 0.0
        %1065 = vmatprep.subr.mxu0 0.0
        %1066 = vmatpush1.xpose.msra.mxu0 0.0
        %1067 = vmatprep.subr.mxu0 0.0
        %1068 = vmatpush1.xpose.msra.mxu0 0.0
        %1069 = vmatprep.subr.mxu0 0.0
        %1070 = vmatpush1.xpose.msra.mxu0 0.0
        %1071 = vmatprep.subr.mxu0 0.0
        %1072 = vmatpush1.xpose.msra.mxu0 0.0
        %1073 = vmatprep.subr.mxu0 0.0
        %1074 = vmatpush1.xpose.msra.mxu0 0.0
        %1075 = vmatprep.subr.mxu0 0.0
        %1076 = vmatpush1.xpose.msra.mxu0 0.0
        %1077 = vmatprep.subr.mxu0 0.0
        %1078 = vmatpush1.xpose.msra.mxu0 0.0
        %1079 = vmatprep.subr.mxu0 0.0
        %1080 = vmatpush1.xpose.msra.mxu0 0.0
        %1081 = vmatprep.subr.mxu0 0.0
        %1082 = vmatpush1.xpose.msra.mxu0 0.0
        %1083 = vmatprep.subr.mxu0 0.0
        %1084 = vmatpush1.xpose.msra.mxu0 0.0
        %1085 = vmatprep.subr.mxu0 0.0
        %1086 = vmatpush1.xpose.msra.mxu0 0.0
        %1087 = vmatprep.subr.mxu0 0.0
        %1088 = vmatpush1.xpose.msra.mxu0 0.0
        %1089 = vmatprep.subr.mxu0 0.0
        %1090 = vmatpush1.xpose.msra.mxu0 0.0
        %1091 = vmatprep.subr.mxu0 0.0
        %1092 = vmatpush1.xpose.msra.mxu0 0.0
        %1093 = vmatprep.subr.mxu0 0.0
        %1094 = vmatpush1.xpose.msra.mxu0 0.0
        %1095 = vmatprep.subr.mxu0 0.0
        %1096 = vmatpush1.xpose.msra.mxu0 0.0
        %1097 = vmatprep.subr.mxu0 0.0
        %1098 = vmatpush1.xpose.msra.mxu0 0.0
        %1099 = vmatprep.mubr.f32.mxu0 0.0
        %1100 = vmatmul.mubr.f32.gmra.mrb[0].mxu0 %v1030
        %v1101 = vpop.f32.mrb[0].mxu0
        %v1102 = vadd.f32 0.0, %v1101
        %v1103 = vpop.f32.mrb[0].mxu0
        %1104 = vdwg.mxu0
        %v1105 = vmul.f32 %v570, 0.17677669
        %v1106 = vmul.f32 %v646, 0.17677669
        %v1107 = vmul.f32 %v722, 0.17677669
        %v1108 = vmul.f32 %v798, 0.17677669
        %v1109 = vmul.f32 %v874, 0.17677669
        %v1110 = vmul.f32 %v950, 0.17677669
        %v1111 = vmul.f32 %v1026, 0.17677669
        %v1112 = vmul.f32 %v1102, 0.17677669
        %v1113 = vlaneseq
        %v1114 = vshrl.u32 %v1113, 7
        %v1115 = vlaneseq
        %v1116 = vand.u32 %v1115, 127
        %vm1117 = vcmp.ge.s32.totalorder %v1114, %v1116
        %v1118 = vsel %vm1117, 1, 0
        %vm1119 = vcmp.eq.s32.totalorder %v1118, 1
        %v1120 = vsel %vm1119, %v1105, -inf
        %v1121 = vsel %vm1119, %v1106, -inf
        %v1122 = vsel %vm1119, %v1107, -inf
        %v1123 = vsel %vm1119, %v1108, -inf
        %v1124 = vsel %vm1119, %v1109, -inf
        %v1125 = vsel %vm1119, %v1110, -inf
        %v1126 = vsel %vm1119, %v1111, -inf
        %v1127 = vsel %vm1119, %v1112, -inf
        %vm1128 = vcmask 64512
        %v1129 = vsel %vm1128, %v1120, -inf
        %1130 = vmax.xlane.f32.xlu0 %v1129
        %v1131 = vpop.xlane.xlu0 %1130
        %v1132 = vsel %vm1128, %v1121, -inf
        %1133 = vmax.xlane.f32.xlu0 %v1132
        %v1134 = vpop.xlane.xlu0 %1133
        %v1135 = vsel %vm1128, %v1122, -inf
        %1136 = vmax.xlane.f32.xlu0 %v1135
        %v1137 = vpop.xlane.xlu0 %1136
        %v1138 = vsel %vm1128, %v1123, -inf
        %1139 = vmax.xlane.f32.xlu0 %v1138
        %v1140 = vpop.xlane.xlu0 %1139
        %v1141 = vsel %vm1128, %v1124, -inf
        %1142 = vmax.xlane.f32.xlu0 %v1141
        %v1143 = vpop.xlane.xlu0 %1142
        %v1144 = vsel %vm1128, %v1125, -inf
        %1145 = vmax.xlane.f32.xlu0 %v1144
        %v1146 = vpop.xlane.xlu0 %1145
        %v1147 = vsel %vm1128, %v1126, -inf
        %1148 = vmax.xlane.f32.xlu0 %v1147
        %v1149 = vpop.xlane.xlu0 %1148
        %v1150 = vsel %vm1128, %v1127, -inf
        %1151 = vmax.xlane.f32.xlu0 %v1150
        %v1152 = vpop.xlane.xlu0 %1151
        %v1153 = vsub.f32 %v1120, %v1131
        %v1154 = vsub.f32 %v1121, %v1134
        %v1155 = vsub.f32 %v1122, %v1137
        %v1156 = vsub.f32 %v1123, %v1140
        %v1157 = vsub.f32 %v1124, %v1143
        %v1158 = vsub.f32 %v1125, %v1146
        %v1159 = vsub.f32 %v1126, %v1149
        %v1160 = vsub.f32 %v1127, %v1152
        %v1161 = vmul.f32 %v1153, 1.442695
        %v1162 = vpow.pop %v1161
        %v1163 = vmul.f32 %v1154, 1.442695
        %v1164 = vpow.pop %v1163
        %v1165 = vmul.f32 %v1155, 1.442695
        %v1166 = vpow.pop %v1165
        %v1167 = vmul.f32 %v1156, 1.442695
        %v1168 = vpow.pop %v1167
        %v1169 = vmul.f32 %v1157, 1.442695
        %v1170 = vpow.pop %v1169
        %v1171 = vmul.f32 %v1158, 1.442695
        %v1172 = vpow.pop %v1171
        %v1173 = vmul.f32 %v1159, 1.442695
        %v1174 = vpow.pop %v1173
        %v1175 = vmul.f32 %v1160, 1.442695
        %v1176 = vpow.pop %v1175
        %v1177 = vsel %vm1128, %v1162, 0.0
        %1178 = vadd.xlane.f32.xlu0 %v1177
        %v1179 = vpop.xlane.xlu0 %1178
        %v1180 = vsel %vm1128, %v1164, 0.0
        %1181 = vadd.xlane.f32.xlu0 %v1180
        %v1182 = vpop.xlane.xlu0 %1181
        %v1183 = vsel %vm1128, %v1166, 0.0
        %1184 = vadd.xlane.f32.xlu0 %v1183
        %v1185 = vpop.xlane.xlu0 %1184
        %v1186 = vsel %vm1128, %v1168, 0.0
        %1187 = vadd.xlane.f32.xlu0 %v1186
        %v1188 = vpop.xlane.xlu0 %1187
        %v1189 = vsel %vm1128, %v1170, 0.0
        %1190 = vadd.xlane.f32.xlu0 %v1189
        %v1191 = vpop.xlane.xlu0 %1190
        %v1192 = vsel %vm1128, %v1172, 0.0
        %1193 = vadd.xlane.f32.xlu0 %v1192
        %v1194 = vpop.xlane.xlu0 %1193
        %v1195 = vsel %vm1128, %v1174, 0.0
        %1196 = vadd.xlane.f32.xlu0 %v1195
        %v1197 = vpop.xlane.xlu0 %1196
        %v1198 = vsel %vm1128, %v1176, 0.0
        %1199 = vadd.xlane.f32.xlu0 %v1198
        %v1200 = vpop.xlane.xlu0 %1199
        %v1201 = vrcp.pop %v1179
        %v1202 = vrcp.pop %v1182
        %v1203 = vrcp.pop %v1185
        %v1204 = vrcp.pop %v1188
        %v1205 = vrcp.pop %v1191
        %v1206 = vrcp.pop %v1194
        %v1207 = vrcp.pop %v1197
        %v1208 = vrcp.pop %v1200
        %v1209 = vmul.f32 %v1162, %v1201
        %v1210 = vmul.f32 %v1164, %v1202
        %v1211 = vmul.f32 %v1166, %v1203
        %v1212 = vmul.f32 %v1168, %v1204
        %v1213 = vmul.f32 %v1170, %v1205
        %v1214 = vmul.f32 %v1172, %v1206
        %v1215 = vmul.f32 %v1174, %v1207
        %v1216 = vmul.f32 %v1176, %v1208
        %v1218 = vsel %vm1128, %v1209, 0
        %1220 = vmatprep.subr.mxu0 0.0
        %1221 = vmatpush1.msra.mxu0 %v309
        %1222 = vmatprep.subr.mxu0 0.0
        %1223 = vmatpush1.msra.mxu0 0.0
        %1224 = vmatprep.subr.mxu0 0.0
        %1225 = vmatpush1.msra.mxu0 0.0
        %1226 = vmatprep.subr.mxu0 0.0
        %1227 = vmatpush1.msra.mxu0 0.0
        %1228 = vmatprep.subr.mxu0 0.0
        %1229 = vmatpush1.msra.mxu0 0.0
        %1230 = vmatprep.subr.mxu0 0.0
        %1231 = vmatpush1.msra.mxu0 0.0
        %1232 = vmatprep.subr.mxu0 0.0
        %1233 = vmatpush1.msra.mxu0 0.0
        %1234 = vmatprep.subr.mxu0 0.0
        %1235 = vmatpush1.msra.mxu0 0.0
        %1236 = vmatprep.subr.mxu0 0.0
        %1237 = vmatpush1.msra.mxu0 0.0
        %1238 = vmatprep.subr.mxu0 0.0
        %1239 = vmatpush1.msra.mxu0 0.0
        %1240 = vmatprep.subr.mxu0 0.0
        %1241 = vmatpush1.msra.mxu0 0.0
        %1242 = vmatprep.subr.mxu0 0.0
        %1243 = vmatpush1.msra.mxu0 0.0
        %1244 = vmatprep.subr.mxu0 0.0
        %1245 = vmatpush1.msra.mxu0 0.0
        %1246 = vmatprep.subr.mxu0 0.0
        %1247 = vmatpush1.msra.mxu0 0.0
        %1248 = vmatprep.subr.mxu0 0.0
        %1249 = vmatpush1.msra.mxu0 0.0
        %1250 = vmatprep.subr.mxu0 0.0
        %1251 = vmatpush1.msra.mxu0 0.0
        %1252 = vmatprep.subr.mxu0 0.0
        %1253 = vmatpush1.msra.mxu0 0.0
        %1254 = vmatprep.subr.mxu0 0.0
        %1255 = vmatpush1.msra.mxu0 0.0
        %1256 = vmatprep.subr.mxu0 0.0
        %1257 = vmatpush1.msra.mxu0 0.0
        %1258 = vmatprep.subr.mxu0 0.0
        %1259 = vmatpush1.msra.mxu0 0.0
        %1260 = vmatprep.subr.mxu0 0.0
        %1261 = vmatpush1.msra.mxu0 0.0
        %1262 = vmatprep.subr.mxu0 0.0
        %1263 = vmatpush1.msra.mxu0 0.0
        %1264 = vmatprep.subr.mxu0 0.0
        %1265 = vmatpush1.msra.mxu0 0.0
        %1266 = vmatprep.subr.mxu0 0.0
        %1267 = vmatpush1.msra.mxu0 0.0
        %1268 = vmatprep.subr.mxu0 0.0
        %1269 = vmatpush1.msra.mxu0 0.0
        %1270 = vmatprep.subr.mxu0 0.0
        %1271 = vmatpush1.msra.mxu0 0.0
        %1272 = vmatprep.subr.mxu0 0.0
        %1273 = vmatpush1.msra.mxu0 0.0
        %1274 = vmatprep.subr.mxu0 0.0
        %1275 = vmatpush1.msra.mxu0 0.0
        %1276 = vmatprep.subr.mxu0 0.0
        %1277 = vmatpush1.msra.mxu0 0.0
        %1278 = vmatprep.subr.mxu0 0.0
        %1279 = vmatpush1.msra.mxu0 0.0
        %1280 = vmatprep.subr.mxu0 0.0
        %1281 = vmatpush1.msra.mxu0 0.0
        %1282 = vmatprep.subr.mxu0 0.0
        %1283 = vmatpush1.msra.mxu0 0.0
        %1284 = vmatprep.mubr.f32.mxu0 0.0
        %1285 = vmatmul.mubr.f32.gmra.mrb[0].mxu0 %v1218
        %v1286 = vpop.f32.mrb[0].mxu0
        %v1287 = vadd.f32 0.0, %v1286
        %v1288 = vpop.f32.mrb[0].mxu0
        %1289 = vdwg.mxu0
        %v1291 = vsel %vm1128, %v1210, 0
        %1293 = vmatprep.subr.mxu0 0.0
        %1294 = vmatpush1.msra.mxu0 %v315
        %1295 = vmatprep.subr.mxu0 0.0
        %1296 = vmatpush1.msra.mxu0 0.0
        %1297 = vmatprep.subr.mxu0 0.0
        %1298 = vmatpush1.msra.mxu0 0.0
        %1299 = vmatprep.subr.mxu0 0.0
        %1300 = vmatpush1.msra.mxu0 0.0
        %1301 = vmatprep.subr.mxu0 0.0
        %1302 = vmatpush1.msra.mxu0 0.0
        %1303 = vmatprep.subr.mxu0 0.0
        %1304 = vmatpush1.msra.mxu0 0.0
        %1305 = vmatprep.subr.mxu0 0.0
        %1306 = vmatpush1.msra.mxu0 0.0
        %1307 = vmatprep.subr.mxu0 0.0
        %1308 = vmatpush1.msra.mxu0 0.0
        %1309 = vmatprep.subr.mxu0 0.0
        %1310 = vmatpush1.msra.mxu0 0.0
        %1311 = vmatprep.subr.mxu0 0.0
        %1312 = vmatpush1.msra.mxu0 0.0
        %1313 = vmatprep.subr.mxu0 0.0
        %1314 = vmatpush1.msra.mxu0 0.0
        %1315 = vmatprep.subr.mxu0 0.0
        %1316 = vmatpush1.msra.mxu0 0.0
        %1317 = vmatprep.subr.mxu0 0.0
        %1318 = vmatpush1.msra.mxu0 0.0
        %1319 = vmatprep.subr.mxu0 0.0
        %1320 = vmatpush1.msra.mxu0 0.0
        %1321 = vmatprep.subr.mxu0 0.0
        %1322 = vmatpush1.msra.mxu0 0.0
        %1323 = vmatprep.subr.mxu0 0.0
        %1324 = vmatpush1.msra.mxu0 0.0
        %1325 = vmatprep.subr.mxu0 0.0
        %1326 = vmatpush1.msra.mxu0 0.0
        %1327 = vmatprep.subr.mxu0 0.0
        %1328 = vmatpush1.msra.mxu0 0.0
        %1329 = vmatprep.subr.mxu0 0.0
        %1330 = vmatpush1.msra.mxu0 0.0
        %1331 = vmatprep.subr.mxu0 0.0
        %1332 = vmatpush1.msra.mxu0 0.0
        %1333 = vmatprep.subr.mxu0 0.0
        %1334 = vmatpush1.msra.mxu0 0.0
        %1335 = vmatprep.subr.mxu0 0.0
        %1336 = vmatpush1.msra.mxu0 0.0
        %1337 = vmatprep.subr.mxu0 0.0
        %1338 = vmatpush1.msra.mxu0 0.0
        %1339 = vmatprep.subr.mxu0 0.0
        %1340 = vmatpush1.msra.mxu0 0.0
        %1341 = vmatprep.subr.mxu0 0.0
        %1342 = vmatpush1.msra.mxu0 0.0
        %1343 = vmatprep.subr.mxu0 0.0
        %1344 = vmatpush1.msra.mxu0 0.0
        %1345 = vmatprep.subr.mxu0 0.0
        %1346 = vmatpush1.msra.mxu0 0.0
        %1347 = vmatprep.subr.mxu0 0.0
        %1348 = vmatpush1.msra.mxu0 0.0
        %1349 = vmatprep.subr.mxu0 0.0
        %1350 = vmatpush1.msra.mxu0 0.0
        %1351 = vmatprep.subr.mxu0 0.0
        %1352 = vmatpush1.msra.mxu0 0.0
        %1353 = vmatprep.subr.mxu0 0.0
        %1354 = vmatpush1.msra.mxu0 0.0
        %1355 = vmatprep.subr.mxu0 0.0
        %1356 = vmatpush1.msra.mxu0 0.0
        %1357 = vmatprep.mubr.f32.mxu0 0.0
        %1358 = vmatmul.mubr.f32.gmra.mrb[0].mxu0 %v1291
        %v1359 = vpop.f32.mrb[0].mxu0
        %v1360 = vadd.f32 0.0, %v1359
        %v1361 = vpop.f32.mrb[0].mxu0
        %1362 = vdwg.mxu0
        %v1364 = vsel %vm1128, %v1211, 0
        %1366 = vmatprep.subr.mxu0 0.0
        %1367 = vmatpush1.msra.mxu0 %v321
        %1368 = vmatprep.subr.mxu0 0.0
        %1369 = vmatpush1.msra.mxu0 0.0
        %1370 = vmatprep.subr.mxu0 0.0
        %1371 = vmatpush1.msra.mxu0 0.0
        %1372 = vmatprep.subr.mxu0 0.0
        %1373 = vmatpush1.msra.mxu0 0.0
        %1374 = vmatprep.subr.mxu0 0.0
        %1375 = vmatpush1.msra.mxu0 0.0
        %1376 = vmatprep.subr.mxu0 0.0
        %1377 = vmatpush1.msra.mxu0 0.0
        %1378 = vmatprep.subr.mxu0 0.0
        %1379 = vmatpush1.msra.mxu0 0.0
        %1380 = vmatprep.subr.mxu0 0.0
        %1381 = vmatpush1.msra.mxu0 0.0
        %1382 = vmatprep.subr.mxu0 0.0
        %1383 = vmatpush1.msra.mxu0 0.0
        %1384 = vmatprep.subr.mxu0 0.0
        %1385 = vmatpush1.msra.mxu0 0.0
        %1386 = vmatprep.subr.mxu0 0.0
        %1387 = vmatpush1.msra.mxu0 0.0
        %1388 = vmatprep.subr.mxu0 0.0
        %1389 = vmatpush1.msra.mxu0 0.0
        %1390 = vmatprep.subr.mxu0 0.0
        %1391 = vmatpush1.msra.mxu0 0.0
        %1392 = vmatprep.subr.mxu0 0.0
        %1393 = vmatpush1.msra.mxu0 0.0
        %1394 = vmatprep.subr.mxu0 0.0
        %1395 = vmatpush1.msra.mxu0 0.0
        %1396 = vmatprep.subr.mxu0 0.0
        %1397 = vmatpush1.msra.mxu0 0.0
        %1398 = vmatprep.subr.mxu0 0.0
        %1399 = vmatpush1.msra.mxu0 0.0
        %1400 = vmatprep.subr.mxu0 0.0
        %1401 = vmatpush1.msra.mxu0 0.0
        %1402 = vmatprep.subr.mxu0 0.0
        %1403 = vmatpush1.msra.mxu0 0.0
        %1404 = vmatprep.subr.mxu0 0.0
        %1405 = vmatpush1.msra.mxu0 0.0
        %1406 = vmatprep.subr.mxu0 0.0
        %1407 = vmatpush1.msra.mxu0 0.0
        %1408 = vmatprep.subr.mxu0 0.0
        %1409 = vmatpush1.msra.mxu0 0.0
        %1410 = vmatprep.subr.mxu0 0.0
        %1411 = vmatpush1.msra.mxu0 0.0
        %1412 = vmatprep.subr.mxu0 0.0
        %1413 = vmatpush1.msra.mxu0 0.0
        %1414 = vmatprep.subr.mxu0 0.0
        %1415 = vmatpush1.msra.mxu0 0.0
        %1416 = vmatprep.subr.mxu0 0.0
        %1417 = vmatpush1.msra.mxu0 0.0
        %1418 = vmatprep.subr.mxu0 0.0
        %1419 = vmatpush1.msra.mxu0 0.0
        %1420 = vmatprep.subr.mxu0 0.0
        %1421 = vmatpush1.msra.mxu0 0.0
        %1422 = vmatprep.subr.mxu0 0.0
        %1423 = vmatpush1.msra.mxu0 0.0
        %1424 = vmatprep.subr.mxu0 0.0
        %1425 = vmatpush1.msra.mxu0 0.0
        %1426 = vmatprep.subr.mxu0 0.0
        %1427 = vmatpush1.msra.mxu0 0.0
        %1428 = vmatprep.subr.mxu0 0.0
        %1429 = vmatpush1.msra.mxu0 0.0
        %1430 = vmatprep.mubr.f32.mxu0 0.0
        %1431 = vmatmul.mubr.f32.gmra.mrb[0].mxu0 %v1364
        %v1432 = vpop.f32.mrb[0].mxu0
        %v1433 = vadd.f32 0.0, %v1432
        %v1434 = vpop.f32.mrb[0].mxu0
        %1435 = vdwg.mxu0
        %v1437 = vsel %vm1128, %v1212, 0
        %1439 = vmatprep.subr.mxu0 0.0
        %1440 = vmatpush1.msra.mxu0 %v327
        %1441 = vmatprep.subr.mxu0 0.0
        %1442 = vmatpush1.msra.mxu0 0.0
        %1443 = vmatprep.subr.mxu0 0.0
        %1444 = vmatpush1.msra.mxu0 0.0
        %1445 = vmatprep.subr.mxu0 0.0
        %1446 = vmatpush1.msra.mxu0 0.0
        %1447 = vmatprep.subr.mxu0 0.0
        %1448 = vmatpush1.msra.mxu0 0.0
        %1449 = vmatprep.subr.mxu0 0.0
        %1450 = vmatpush1.msra.mxu0 0.0
        %1451 = vmatprep.subr.mxu0 0.0
        %1452 = vmatpush1.msra.mxu0 0.0
        %1453 = vmatprep.subr.mxu0 0.0
        %1454 = vmatpush1.msra.mxu0 0.0
        %1455 = vmatprep.subr.mxu0 0.0
        %1456 = vmatpush1.msra.mxu0 0.0
        %1457 = vmatprep.subr.mxu0 0.0
        %1458 = vmatpush1.msra.mxu0 0.0
        %1459 = vmatprep.subr.mxu0 0.0
        %1460 = vmatpush1.msra.mxu0 0.0
        %1461 = vmatprep.subr.mxu0 0.0
        %1462 = vmatpush1.msra.mxu0 0.0
        %1463 = vmatprep.subr.mxu0 0.0
        %1464 = vmatpush1.msra.mxu0 0.0
        %1465 = vmatprep.subr.mxu0 0.0
        %1466 = vmatpush1.msra.mxu0 0.0
        %1467 = vmatprep.subr.mxu0 0.0
        %1468 = vmatpush1.msra.mxu0 0.0
        %1469 = vmatprep.subr.mxu0 0.0
        %1470 = vmatpush1.msra.mxu0 0.0
        %1471 = vmatprep.subr.mxu0 0.0
        %1472 = vmatpush1.msra.mxu0 0.0
        %1473 = vmatprep.subr.mxu0 0.0
        %1474 = vmatpush1.msra.mxu0 0.0
        %1475 = vmatprep.subr.mxu0 0.0
        %1476 = vmatpush1.msra.mxu0 0.0
        %1477 = vmatprep.subr.mxu0 0.0
        %1478 = vmatpush1.msra.mxu0 0.0
        %1479 = vmatprep.subr.mxu0 0.0
        %1480 = vmatpush1.msra.mxu0 0.0
        %1481 = vmatprep.subr.mxu0 0.0
        %1482 = vmatpush1.msra.mxu0 0.0
        %1483 = vmatprep.subr.mxu0 0.0
        %1484 = vmatpush1.msra.mxu0 0.0
        %1485 = vmatprep.subr.mxu0 0.0
        %1486 = vmatpush1.msra.mxu0 0.0
        %1487 = vmatprep.subr.mxu0 0.0
        %1488 = vmatpush1.msra.mxu0 0.0
        %1489 = vmatprep.subr.mxu0 0.0
        %1490 = vmatpush1.msra.mxu0 0.0
        %1491 = vmatprep.subr.mxu0 0.0
        %1492 = vmatpush1.msra.mxu0 0.0
        %1493 = vmatprep.subr.mxu0 0.0
        %1494 = vmatpush1.msra.mxu0 0.0
        %1495 = vmatprep.subr.mxu0 0.0
        %1496 = vmatpush1.msra.mxu0 0.0
        %1497 = vmatprep.subr.mxu0 0.0
        %1498 = vmatpush1.msra.mxu0 0.0
        %1499 = vmatprep.subr.mxu0 0.0
        %1500 = vmatpush1.msra.mxu0 0.0
        %1501 = vmatprep.subr.mxu0 0.0
        %1502 = vmatpush1.msra.mxu0 0.0
        %1503 = vmatprep.mubr.f32.mxu0 0.0
        %1504 = vmatmul.mubr.f32.gmra.mrb[0].mxu0 %v1437
        %v1505 = vpop.f32.mrb[0].mxu0
        %v1506 = vadd.f32 0.0, %v1505
        %v1507 = vpop.f32.mrb[0].mxu0
        %1508 = vdwg.mxu0
        %v1510 = vsel %vm1128, %v1213, 0
        %1512 = vmatprep.subr.mxu0 0.0
        %1513 = vmatpush1.msra.mxu0 %v333
        %1514 = vmatprep.subr.mxu0 0.0
        %1515 = vmatpush1.msra.mxu0 0.0
        %1516 = vmatprep.subr.mxu0 0.0
        %1517 = vmatpush1.msra.mxu0 0.0
        %1518 = vmatprep.subr.mxu0 0.0
        %1519 = vmatpush1.msra.mxu0 0.0
        %1520 = vmatprep.subr.mxu0 0.0
        %1521 = vmatpush1.msra.mxu0 0.0
        %1522 = vmatprep.subr.mxu0 0.0
        %1523 = vmatpush1.msra.mxu0 0.0
        %1524 = vmatprep.subr.mxu0 0.0
        %1525 = vmatpush1.msra.mxu0 0.0
        %1526 = vmatprep.subr.mxu0 0.0
        %1527 = vmatpush1.msra.mxu0 0.0
        %1528 = vmatprep.subr.mxu0 0.0
        %1529 = vmatpush1.msra.mxu0 0.0
        %1530 = vmatprep.subr.mxu0 0.0
        %1531 = vmatpush1.msra.mxu0 0.0
        %1532 = vmatprep.subr.mxu0 0.0
        %1533 = vmatpush1.msra.mxu0 0.0
        %1534 = vmatprep.subr.mxu0 0.0
        %1535 = vmatpush1.msra.mxu0 0.0
        %1536 = vmatprep.subr.mxu0 0.0
        %1537 = vmatpush1.msra.mxu0 0.0
        %1538 = vmatprep.subr.mxu0 0.0
        %1539 = vmatpush1.msra.mxu0 0.0
        %1540 = vmatprep.subr.mxu0 0.0
        %1541 = vmatpush1.msra.mxu0 0.0
        %1542 = vmatprep.subr.mxu0 0.0
        %1543 = vmatpush1.msra.mxu0 0.0
        %1544 = vmatprep.subr.mxu0 0.0
        %1545 = vmatpush1.msra.mxu0 0.0
        %1546 = vmatprep.subr.mxu0 0.0
        %1547 = vmatpush1.msra.mxu0 0.0
        %1548 = vmatprep.subr.mxu0 0.0
        %1549 = vmatpush1.msra.mxu0 0.0
        %1550 = vmatprep.subr.mxu0 0.0
        %1551 = vmatpush1.msra.mxu0 0.0
        %1552 = vmatprep.subr.mxu0 0.0
        %1553 = vmatpush1.msra.mxu0 0.0
        %1554 = vmatprep.subr.mxu0 0.0
        %1555 = vmatpush1.msra.mxu0 0.0
        %1556 = vmatprep.subr.mxu0 0.0
        %1557 = vmatpush1.msra.mxu0 0.0
        %1558 = vmatprep.subr.mxu0 0.0
        %1559 = vmatpush1.msra.mxu0 0.0
        %1560 = vmatprep.subr.mxu0 0.0
        %1561 = vmatpush1.msra.mxu0 0.0
        %1562 = vmatprep.subr.mxu0 0.0
        %1563 = vmatpush1.msra.mxu0 0.0
        %1564 = vmatprep.subr.mxu0 0.0
        %1565 = vmatpush1.msra.mxu0 0.0
        %1566 = vmatprep.subr.mxu0 0.0
        %1567 = vmatpush1.msra.mxu0 0.0
        %1568 = vmatprep.subr.mxu0 0.0
        %1569 = vmatpush1.msra.mxu0 0.0
        %1570 = vmatprep.subr.mxu0 0.0
        %1571 = vmatpush1.msra.mxu0 0.0
        %1572 = vmatprep.subr.mxu0 0.0
        %1573 = vmatpush1.msra.mxu0 0.0
        %1574 = vmatprep.subr.mxu0 0.0
        %1575 = vmatpush1.msra.mxu0 0.0
        %1576 = vmatprep.mubr.f32.mxu0 0.0
        %1577 = vmatmul.mubr.f32.gmra.mrb[0].mxu0 %v1510
        %v1578 = vpop.f32.mrb[0].mxu0
        %v1579 = vadd.f32 0.0, %v1578
        %v1580 = vpop.f32.mrb[0].mxu0
        %1581 = vdwg.mxu0
        %v1583 = vsel %vm1128, %v1214, 0
        %1585 = vmatprep.subr.mxu0 0.0
        %1586 = vmatpush1.msra.mxu0 %v339
        %1587 = vmatprep.subr.mxu0 0.0
        %1588 = vmatpush1.msra.mxu0 0.0
        %1589 = vmatprep.subr.mxu0 0.0
        %1590 = vmatpush1.msra.mxu0 0.0
        %1591 = vmatprep.subr.mxu0 0.0
        %1592 = vmatpush1.msra.mxu0 0.0
        %1593 = vmatprep.subr.mxu0 0.0
        %1594 = vmatpush1.msra.mxu0 0.0
        %1595 = vmatprep.subr.mxu0 0.0
        %1596 = vmatpush1.msra.mxu0 0.0
        %1597 = vmatprep.subr.mxu0 0.0
        %1598 = vmatpush1.msra.mxu0 0.0
        %1599 = vmatprep.subr.mxu0 0.0
        %1600 = vmatpush1.msra.mxu0 0.0
        %1601 = vmatprep.subr.mxu0 0.0
        %1602 = vmatpush1.msra.mxu0 0.0
        %1603 = vmatprep.subr.mxu0 0.0
        %1604 = vmatpush1.msra.mxu0 0.0
        %1605 = vmatprep.subr.mxu0 0.0
        %1606 = vmatpush1.msra.mxu0 0.0
        %1607 = vmatprep.subr.mxu0 0.0
        %1608 = vmatpush1.msra.mxu0 0.0
        %1609 = vmatprep.subr.mxu0 0.0
        %1610 = vmatpush1.msra.mxu0 0.0
        %1611 = vmatprep.subr.mxu0 0.0
        %1612 = vmatpush1.msra.mxu0 0.0
        %1613 = vmatprep.subr.mxu0 0.0
        %1614 = vmatpush1.msra.mxu0 0.0
        %1615 = vmatprep.subr.mxu0 0.0
        %1616 = vmatpush1.msra.mxu0 0.0
        %1617 = vmatprep.subr.mxu0 0.0
        %1618 = vmatpush1.msra.mxu0 0.0
        %1619 = vmatprep.subr.mxu0 0.0
        %1620 = vmatpush1.msra.mxu0 0.0
        %1621 = vmatprep.subr.mxu0 0.0
        %1622 = vmatpush1.msra.mxu0 0.0
        %1623 = vmatprep.subr.mxu0 0.0
        %1624 = vmatpush1.msra.mxu0 0.0
        %1625 = vmatprep.subr.mxu0 0.0
        %1626 = vmatpush1.msra.mxu0 0.0
        %1627 = vmatprep.subr.mxu0 0.0
        %1628 = vmatpush1.msra.mxu0 0.0
        %1629 = vmatprep.subr.mxu0 0.0
        %1630 = vmatpush1.msra.mxu0 0.0
        %1631 = vmatprep.subr.mxu0 0.0
        %1632 = vmatpush1.msra.mxu0 0.0
        %1633 = vmatprep.subr.mxu0 0.0
        %1634 = vmatpush1.msra.mxu0 0.0
        %1635 = vmatprep.subr.mxu0 0.0
        %1636 = vmatpush1.msra.mxu0 0.0
        %1637 = vmatprep.subr.mxu0 0.0
        %1638 = vmatpush1.msra.mxu0 0.0
        %1639 = vmatprep.subr.mxu0 0.0
        %1640 = vmatpush1.msra.mxu0 0.0
        %1641 = vmatprep.subr.mxu0 0.0
        %1642 = vmatpush1.msra.mxu0 0.0
        %1643 = vmatprep.subr.mxu0 0.0
        %1644 = vmatpush1.msra.mxu0 0.0
        %1645 = vmatprep.subr.mxu0 0.0
        %1646 = vmatpush1.msra.mxu0 0.0
        %1647 = vmatprep.subr.mxu0 0.0
        %1648 = vmatpush1.msra.mxu0 0.0
        %1649 = vmatprep.mubr.f32.mxu0 0.0
        %1650 = vmatmul.mubr.f32.gmra.mrb[0].mxu0 %v1583
        %v1651 = vpop.f32.mrb[0].mxu0
        %v1652 = vadd.f32 0.0, %v1651
        %v1653 = vpop.f32.mrb[0].mxu0
        %1654 = vdwg.mxu0
        %v1656 = vsel %vm1128, %v1215, 0
        %1658 = vmatprep.subr.mxu0 0.0
        %1659 = vmatpush1.msra.mxu0 %v345
        %1660 = vmatprep.subr.mxu0 0.0
        %1661 = vmatpush1.msra.mxu0 0.0
        %1662 = vmatprep.subr.mxu0 0.0
        %1663 = vmatpush1.msra.mxu0 0.0
        %1664 = vmatprep.subr.mxu0 0.0
        %1665 = vmatpush1.msra.mxu0 0.0
        %1666 = vmatprep.subr.mxu0 0.0
        %1667 = vmatpush1.msra.mxu0 0.0
        %1668 = vmatprep.subr.mxu0 0.0
        %1669 = vmatpush1.msra.mxu0 0.0
        %1670 = vmatprep.subr.mxu0 0.0
        %1671 = vmatpush1.msra.mxu0 0.0
        %1672 = vmatprep.subr.mxu0 0.0
        %1673 = vmatpush1.msra.mxu0 0.0
        %1674 = vmatprep.subr.mxu0 0.0
        %1675 = vmatpush1.msra.mxu0 0.0
        %1676 = vmatprep.subr.mxu0 0.0
        %1677 = vmatpush1.msra.mxu0 0.0
        %1678 = vmatprep.subr.mxu0 0.0
        %1679 = vmatpush1.msra.mxu0 0.0
        %1680 = vmatprep.subr.mxu0 0.0
        %1681 = vmatpush1.msra.mxu0 0.0
        %1682 = vmatprep.subr.mxu0 0.0
        %1683 = vmatpush1.msra.mxu0 0.0
        %1684 = vmatprep.subr.mxu0 0.0
        %1685 = vmatpush1.msra.mxu0 0.0
        %1686 = vmatprep.subr.mxu0 0.0
        %1687 = vmatpush1.msra.mxu0 0.0
        %1688 = vmatprep.subr.mxu0 0.0
        %1689 = vmatpush1.msra.mxu0 0.0
        %1690 = vmatprep.subr.mxu0 0.0
        %1691 = vmatpush1.msra.mxu0 0.0
        %1692 = vmatprep.subr.mxu0 0.0
        %1693 = vmatpush1.msra.mxu0 0.0
        %1694 = vmatprep.subr.mxu0 0.0
        %1695 = vmatpush1.msra.mxu0 0.0
        %1696 = vmatprep.subr.mxu0 0.0
        %1697 = vmatpush1.msra.mxu0 0.0
        %1698 = vmatprep.subr.mxu0 0.0
        %1699 = vmatpush1.msra.mxu0 0.0
        %1700 = vmatprep.subr.mxu0 0.0
        %1701 = vmatpush1.msra.mxu0 0.0
        %1702 = vmatprep.subr.mxu0 0.0
        %1703 = vmatpush1.msra.mxu0 0.0
        %1704 = vmatprep.subr.mxu0 0.0
        %1705 = vmatpush1.msra.mxu0 0.0
        %1706 = vmatprep.subr.mxu0 0.0
        %1707 = vmatpush1.msra.mxu0 0.0
        %1708 = vmatprep.subr.mxu0 0.0
        %1709 = vmatpush1.msra.mxu0 0.0
        %1710 = vmatprep.subr.mxu0 0.0
        %1711 = vmatpush1.msra.mxu0 0.0
        %1712 = vmatprep.subr.mxu0 0.0
        %1713 = vmatpush1.msra.mxu0 0.0
        %1714 = vmatprep.subr.mxu0 0.0
        %1715 = vmatpush1.msra.mxu0 0.0
        %1716 = vmatprep.subr.mxu0 0.0
        %1717 = vmatpush1.msra.mxu0 0.0
        %1718 = vmatprep.subr.mxu0 0.0
        %1719 = vmatpush1.msra.mxu0 0.0
        %1720 = vmatprep.subr.mxu0 0.0
        %1721 = vmatpush1.msra.mxu0 0.0
        %1722 = vmatprep.mubr.f32.mxu0 0.0
        %1723 = vmatmul.mubr.f32.gmra.mrb[0].mxu0 %v1656
        %v1724 = vpop.f32.mrb[0].mxu0
        %v1725 = vadd.f32 0.0, %v1724
        %v1726 = vpop.f32.mrb[0].mxu0
        %1727 = vdwg.mxu0
        %v1729 = vsel %vm1128, %v1216, 0
        %1731 = vmatprep.subr.mxu0 0.0
        %1732 = vmatpush1.msra.mxu0 %v351
        %1733 = vmatprep.subr.mxu0 0.0
        %1734 = vmatpush1.msra.mxu0 0.0
        %1735 = vmatprep.subr.mxu0 0.0
        %1736 = vmatpush1.msra.mxu0 0.0
        %1737 = vmatprep.subr.mxu0 0.0
        %1738 = vmatpush1.msra.mxu0 0.0
        %1739 = vmatprep.subr.mxu0 0.0
        %1740 = vmatpush1.msra.mxu0 0.0
        %1741 = vmatprep.subr.mxu0 0.0
        %1742 = vmatpush1.msra.mxu0 0.0
        %1743 = vmatprep.subr.mxu0 0.0
        %1744 = vmatpush1.msra.mxu0 0.0
        %1745 = vmatprep.subr.mxu0 0.0
        %1746 = vmatpush1.msra.mxu0 0.0
        %1747 = vmatprep.subr.mxu0 0.0
        %1748 = vmatpush1.msra.mxu0 0.0
        %1749 = vmatprep.subr.mxu0 0.0
        %1750 = vmatpush1.msra.mxu0 0.0
        %1751 = vmatprep.subr.mxu0 0.0
        %1752 = vmatpush1.msra.mxu0 0.0
        %1753 = vmatprep.subr.mxu0 0.0
        %1754 = vmatpush1.msra.mxu0 0.0
        %1755 = vmatprep.subr.mxu0 0.0
        %1756 = vmatpush1.msra.mxu0 0.0
        %1757 = vmatprep.subr.mxu0 0.0
        %1758 = vmatpush1.msra.mxu0 0.0
        %1759 = vmatprep.subr.mxu0 0.0
        %1760 = vmatpush1.msra.mxu0 0.0
        %1761 = vmatprep.subr.mxu0 0.0
        %1762 = vmatpush1.msra.mxu0 0.0
        %1763 = vmatprep.subr.mxu0 0.0
        %1764 = vmatpush1.msra.mxu0 0.0
        %1765 = vmatprep.subr.mxu0 0.0
        %1766 = vmatpush1.msra.mxu0 0.0
        %1767 = vmatprep.subr.mxu0 0.0
        %1768 = vmatpush1.msra.mxu0 0.0
        %1769 = vmatprep.subr.mxu0 0.0
        %1770 = vmatpush1.msra.mxu0 0.0
        %1771 = vmatprep.subr.mxu0 0.0
        %1772 = vmatpush1.msra.mxu0 0.0
        %1773 = vmatprep.subr.mxu0 0.0
        %1774 = vmatpush1.msra.mxu0 0.0
        %1775 = vmatprep.subr.mxu0 0.0
        %1776 = vmatpush1.msra.mxu0 0.0
        %1777 = vmatprep.subr.mxu0 0.0
        %1778 = vmatpush1.msra.mxu0 0.0
        %1779 = vmatprep.subr.mxu0 0.0
        %1780 = vmatpush1.msra.mxu0 0.0
        %1781 = vmatprep.subr.mxu0 0.0
        %1782 = vmatpush1.msra.mxu0 0.0
        %1783 = vmatprep.subr.mxu0 0.0
        %1784 = vmatpush1.msra.mxu0 0.0
        %1785 = vmatprep.subr.mxu0 0.0
        %1786 = vmatpush1.msra.mxu0 0.0
        %1787 = vmatprep.subr.mxu0 0.0
        %1788 = vmatpush1.msra.mxu0 0.0
        %1789 = vmatprep.subr.mxu0 0.0
        %1790 = vmatpush1.msra.mxu0 0.0
        %1791 = vmatprep.subr.mxu0 0.0
        %1792 = vmatpush1.msra.mxu0 0.0
        %1793 = vmatprep.subr.mxu0 0.0
        %1794 = vmatpush1.msra.mxu0 0.0
        %1795 = vmatprep.mubr.f32.mxu0 0.0
        %1796 = vmatmul.mubr.f32.gmra.mrb[0].mxu0 %v1729
        %v1797 = vpop.f32.mrb[0].mxu0
        %v1798 = vadd.f32 0.0, %v1797
        %v1799 = vpop.f32.mrb[0].mxu0
        %1800 = vdwg.mxu0
        %1801 = vst.msk [vmem:[%s191] sm:$0xff] %vm215, %v1287
        %1802 = vst.msk [vmem:[%s191 + $0x8] sm:$0xff] %vm215, %v1360
        %1803 = vst.msk [vmem:[%s191 + $0x10] sm:$0xff] %vm215, %v1433
        %1804 = vst.msk [vmem:[%s191 + $0x18] sm:$0xff] %vm215, %v1506
        %1805 = vst.msk [vmem:[%s191 + $0x20] sm:$0xff] %vm215, %v1579
        %1806 = vst.msk [vmem:[%s191 + $0x28] sm:$0xff] %vm215, %v1652
        %1807 = vst.msk [vmem:[%s191 + $0x30] sm:$0xff] %vm215, %v1725
        %1808 = vst.msk [vmem:[%s191 + $0x38] sm:$0xff] %vm215, %v1798
        %s1809 = sand.u32 %s115, 1
        %s1810 = scalar_lea.sflag [#allocation3], %s1809
        %s1811 = sand.u32 %s115, 1
        %s1812 = smul.addr %s1811, 64
        %s1813 = scalar_lea.vmem [#allocation2], %s1812
        // Predicated region
        $region37: #{tpu_custom_call.1} parent=35 // pred_check
          %p1814 = pneg %p125
        $region38: #{tpu_custom_call.1} parent=35 // pred_check_branch
          %1816 = sbr.rel (%p1814) target = $region40
        $region39: #{tpu_custom_call.1} parent=35 // pred_region
          %s1817 = smul.u32 8, %s18
          %s1819 = ssub.s32 1024, 1024
          %1820 = vsyncadd %s1810, %s1819
          %s1821 = smul.addr %s1817, 128
          %s1822 = scalar_lea.hbm %s4, %s1821
          %s1823 = sshll.u32 %s1813, 4
          %s1824 = int_to_ptr.vmem [resolvable:$true] %s1823
          %1829 = dma.vmem_to_hbm [thread:$0]  %s1824, 1024, %s1822, %s1810, 128, 128, 8
        $region40: #{tpu_custom_call.1} parent=35 // pred_fallthru
          _
      $region36: #{tpu_custom_call.1} parent=5 // pred_fallthru
        _
      %p1830 = scmp.le.s32.totalorder 2, %s13
      // Predicated region
      $region41: #{tpu_custom_call.1} parent=5 // pred_check
        %p1831 = pneg %p1830
      $region42: #{tpu_custom_call.1} parent=5 // pred_check_branch
        %1833 = sbr.rel (%p1831) target = $region44
      $region43: #{tpu_custom_call.1} parent=5 // pred_region
        %s1834 = ssub.s32 %s13, 2
        // Predicated region
        $region45: #{tpu_custom_call.1} parent=43 // pred_check
          %p1835 = pneg %p131
        $region46: #{tpu_custom_call.1} parent=43 // pred_check_branch
          %1837 = sbr.rel (%p1835) target = $region48
        $region47: #{tpu_custom_call.1} parent=43 // pred_region
          %s1838 = sand.u32 %s116, 1
          %s1839 = scalar_lea.sflag [#allocation3], %s1838
          %s1840 = sand.u32 %s116, 1
          %s1841 = smul.addr %s1840, 64
          %s1842 = scalar_lea.vmem [#allocation2], %s1841
          %1843 = dma.done %s1839, 1024
        $region48: #{tpu_custom_call.1} parent=43 // pred_fallthru
          _
      $region44: #{tpu_custom_call.1} parent=5 // pred_fallthru
        _
    $region6: #{tpu_custom_call.1} parent=1 // loop_footer
      %s17 = sadd.s32 1, %s13
    $region7: #{tpu_custom_call.1} parent=1 // loop_footer_branch
      %12 = sbr.rel target = $region3
    $region8: #{tpu_custom_call.1} parent=1 // loop_exit
      _
    %1844 = vsyncpa [#allocation3], 1
    %s1845 = scalar_lea.sflag [#allocation3], 1
    %1846 = vsyncpa %s1845, 1

</llo_original>
